<compile_context>
chip_gen: v7x
topology: tpu7x:2x2x1
jax: 0.10.0
libtpu: 0.0.40
codegen_flags: <defaults>
</compile_context>

<pallas_src>
import functools

import jax
import jax.numpy as jnp
from jax.experimental import pallas as pl
from jax.experimental.pallas import tpu as pltpu

NUM_CLASSES = 8          # len(sig_types)
H1 = 1024                # LazyLinear(1024)
H2 = 256                 # Linear(1024, 256)
C_PAD = 128              # padded class dim for lane-dense output
MAX_TK = 2048            # max K-tile for the first matmul (w1 block <= 4 MiB bf16)


def _fused_mlp_kernel(x_ref, w1_ref, b1_ref, w2_ref, b2_ref, w3_ref, b3_ref,
                      o_ref, acc_ref):
    k = pl.program_id(0)

    # Layer 1 partial: accumulate x[:, k-tile] @ w1[k-tile, :] in f32.
    @pl.when(k == 0)
    def _():
        acc_ref[...] = jnp.zeros_like(acc_ref)

    acc_ref[...] += jnp.dot(x_ref[...].astype(jnp.bfloat16), w1_ref[...],
                            preferred_element_type=jnp.float32)

    # On the last K step: bias+ReLU, then layers 2 and 3 (fully resident).
    @pl.when(k == pl.num_programs(0) - 1)
    def _():
        h1 = jnp.maximum(acc_ref[...] + b1_ref[...], 0.0)
        h2 = jnp.dot(h1.astype(jnp.bfloat16), w2_ref[...],
                     preferred_element_type=jnp.float32) + b2_ref[...]
        h2 = jnp.maximum(h2, 0.0)
        o_ref[...] = jnp.dot(h2.astype(jnp.bfloat16), w3_ref[...],
                             preferred_element_type=jnp.float32) + b3_ref[...]


def prepare_params(w1, b1, w2, b2, w3, b3, *, max_tk=MAX_TK):
    """One-time parameter prep: bf16 weights, K padding, padded last layer.

    Inputs: f32 weights in (in_features, out_features) layout, 1-D biases.
    """
    d_in = w1.shape[0]
    if d_in > max_tk:
        d_in_p = ((d_in + max_tk - 1) // max_tk) * max_tk  # pad K to tile multiple
    else:
        d_in_p = d_in
    w1_p = jnp.zeros((d_in_p, H1), jnp.float32).at[:d_in].set(w1)
    w1_p = w1_p.astype(jnp.bfloat16)
    w2_p = w2.astype(jnp.bfloat16)
    w3_p = jnp.zeros((H2, C_PAD), jnp.float32).at[:, :NUM_CLASSES].set(w3)
    w3_p = w3_p.astype(jnp.bfloat16)
    b1_p = b1.reshape(1, H1).astype(jnp.float32)
    b2_p = b2.reshape(1, H2).astype(jnp.float32)
    b3_p = jnp.zeros((1, C_PAD), jnp.float32).at[:, :NUM_CLASSES].set(b3)
    return (w1_p, b1_p, w2_p, b2_p, w3_p, b3_p)


@functools.partial(jax.jit, static_argnames=("max_tk",))
def _forward_jit(x, w1, b1, w2, b2, w3, b3, *, max_tk):
    B, d_in = x.shape
    d_in_p = w1.shape[0]
    if d_in_p != d_in:
        # Zero-pad activations to the padded K (exact: padded w1 rows are 0).
        x = jnp.pad(x, ((0, 0), (0, d_in_p - d_in)))

    tk = d_in_p if d_in_p <= max_tk else max_tk
    kt = d_in_p // tk

    # VMEM budget computed from the actual working set (+ headroom), instead
    # of requesting the whole physical VMEM (v7x only has 64 MiB per TC).
    block_bytes = (B * tk * 4            # x tile (f32)
                   + tk * H1 * 2         # w1 tile (bf16)
                   + H1 * 4 + H2 * 4 + C_PAD * 4   # biases (f32)
                   + H1 * H2 * 2 + H2 * C_PAD * 2  # w2, w3 (bf16)
                   + B * C_PAD * 4)      # output tile (f32)
    vmem_limit = int(min(2 * block_bytes + B * H1 * 4 + (4 << 20), 48 << 20))

    cost = pl.CostEstimate(
        flops=2 * B * (d_in_p * H1 + H1 * H2 + H2 * C_PAD),
        transcendentals=0,
        bytes_accessed=(B * d_in_p * 4 + d_in_p * H1 * 2 + H1 * 4
                        + H1 * H2 * 2 + H2 * 4 + H2 * C_PAD * 2 + C_PAD * 4
                        + B * C_PAD * 4),
    )

    grid_spec = pltpu.PrefetchScalarGridSpec(
        num_scalar_prefetch=0,
        grid=(kt,),
        in_specs=[
            pl.BlockSpec((B, tk), lambda k: (0, k)),      # x: K-tiled
            pl.BlockSpec((tk, H1), lambda k: (k, 0)),     # w1: K-tiled
            pl.BlockSpec((1, H1), lambda k: (0, 0)),      # b1 (resident)
            pl.BlockSpec((H1, H2), lambda k: (0, 0)),     # w2 (resident)
            pl.BlockSpec((1, H2), lambda k: (0, 0)),      # b2 (resident)
            pl.BlockSpec((H2, C_PAD), lambda k: (0, 0)),  # w3 padded (resident)
            pl.BlockSpec((1, C_PAD), lambda k: (0, 0)),   # b3 padded (resident)
        ],
        out_specs=pl.BlockSpec((B, C_PAD), lambda k: (0, 0)),
        scratch_shapes=[pltpu.VMEM((B, H1), jnp.float32)],  # layer-1 accumulator
    )

    out_padded = pl.pallas_call(
        _fused_mlp_kernel,
        out_shape=jax.ShapeDtypeStruct((B, C_PAD), jnp.float32),
        grid_spec=grid_spec,
        compiler_params=pltpu.CompilerParams(
            dimension_semantics=("arbitrary",),   # K axis is a reduction
            vmem_limit_bytes=vmem_limit),
        cost_estimate=cost,
    )(x, w1, b1, w2, b2, w3, b3)

    return out_padded[:, :NUM_CLASSES]


def fusion_model_forward(x, params, *, max_tk=MAX_TK):
    """x: (B, D_in) f32; params from prepare_params(). Returns (B, 8) f32."""
    return _forward_jit(x, *params, max_tk=max_tk)


def init_params(key, d_in):
    """Deterministic raw f32 params (Linear-style fan-in uniform init)."""
    ks = jax.random.split(key, 6)

    def lin(kw, kb, fan_in, fan_out):
        bound = 1.0 / jnp.sqrt(fan_in)
        w = jax.random.uniform(kw, (fan_in, fan_out), jnp.float32, -bound, bound)
        b = jax.random.uniform(kb, (fan_out,), jnp.float32, -bound, bound)
        return w, b

    w1, b1 = lin(ks[0], ks[1], d_in, H1)
    w2, b2 = lin(ks[2], ks[3], H1, H2)
    w3, b3 = lin(ks[4], ks[5], H2, NUM_CLASSES)
    return w1, b1, w2, b2, w3, b3


def reference_forward(x, w1, b1, w2, b2, w3, b3):
    """Pure-JAX reference matching the kernel's bf16-in / f32-accumulate math."""
    def mm(a, b):
        return jnp.dot(a.astype(jnp.bfloat16), b.astype(jnp.bfloat16),
                       preferred_element_type=jnp.float32)
    h1 = jnp.maximum(mm(x, w1) + b1, 0.0)
    h2 = jnp.maximum(mm(h1, w2) + b2, 0.0)
    return mm(h2, w3) + b3


if __name__ == "__main__":
    key = jax.random.PRNGKey(0)
    k_x, k_p, k_x2, k_p2 = jax.random.split(key, 4)

    # --- Test 1: small D_in -> single-step fully fused path -----------------
    B, D_IN = 8, 256
    x = jax.random.normal(k_x, (B, D_IN), jnp.float32)
    raw = init_params(k_p, D_IN)
    params = prepare_params(*raw)
    out = jax.block_until_ready(fusion_model_forward(x, params))
    ref = reference_forward(x, *raw)
    assert out.shape == (B, NUM_CLASSES)
    assert jnp.allclose(out, ref, atol=1e-3, rtol=1e-3), "mismatch (fused path)"

    # --- Test 2: K-tiled path (D_in not a multiple of the K tile) -----------
    D_IN2, TK2 = 384, 256
    x2 = jax.random.normal(k_x2, (B, D_IN2), jnp.float32)
    raw2 = init_params(k_p2, D_IN2)
    params2 = prepare_params(*raw2, max_tk=TK2)
    out2 = jax.block_until_ready(fusion_model_forward(x2, params2, max_tk=TK2))
    ref2 = reference_forward(x2, *raw2)
    assert out2.shape == (B, NUM_CLASSES)
    assert jnp.allclose(out2, ref2, atol=1e-3, rtol=1e-3), "mismatch (K-tiled path)"

    print("KERNEL_OK")
</pallas_src>

<mosaic_0001>
module attributes {stable_mosaic.version = 11 : i64} {
  func.func @_fused_mlp_kernel(%arg0: i32, %arg1: memref<8x256xf32, #tpu.memory_space<vmem>>, %arg2: memref<256x1024xbf16, #tpu.memory_space<vmem>>, %arg3: memref<1x1024xf32, #tpu.memory_space<vmem>>, %arg4: memref<1024x256xbf16, #tpu.memory_space<vmem>>, %arg5: memref<1x256xf32, #tpu.memory_space<vmem>>, %arg6: memref<256x128xbf16, #tpu.memory_space<vmem>>, %arg7: memref<1x128xf32, #tpu.memory_space<vmem>>, %arg8: memref<8x128xf32, #tpu.memory_space<vmem>>, %arg9: memref<8x1024xf32, #tpu.memory_space<vmem>>) attributes {dimension_semantics = [#tpu.dimension_semantics<arbitrary>], iteration_bounds = array<i64: 1>, scalar_prefetch = 0 : i64, scratch_operands = 1 : i64, tpu.core_type = #tpu.core_type<tc>, window_params = [{transform_indices = @transform_0, window_bounds = array<i64: 8, 256>}, {transform_indices = @transform_1, window_bounds = array<i64: 256, 1024>}, {pipeline_mode = #tpu.pipeline_mode<synchronous>, transform_indices = @transform_2, window_bounds = array<i64: 1, 1024>}, {pipeline_mode = #tpu.pipeline_mode<synchronous>, transform_indices = @transform_3, window_bounds = array<i64: 1024, 256>}, {pipeline_mode = #tpu.pipeline_mode<synchronous>, transform_indices = @transform_4, window_bounds = array<i64: 1, 256>}, {pipeline_mode = #tpu.pipeline_mode<synchronous>, transform_indices = @transform_5, window_bounds = array<i64: 256, 128>}, {pipeline_mode = #tpu.pipeline_mode<synchronous>, transform_indices = @transform_6, window_bounds = array<i64: 1, 128>}, {pipeline_mode = #tpu.pipeline_mode<synchronous>, transform_indices = @transform_7, window_bounds = array<i64: 8, 128>}]} {
    %c0_i32 = arith.constant 0 : i32
    %0 = arith.cmpi eq, %arg0, %c0_i32 : i32
    %1 = arith.extui %0 : i1 to i32
    %c0_i32_0 = arith.constant 0 : i32
    %2 = arith.cmpi ne, %1, %c0_i32_0 : i32
    scf.if %2 {
      %cst_10 = arith.constant 0.000000e+00 : f32
      %13 = vector.broadcast %cst_10 : f32 to vector<8x1024xf32>
      %c0_11 = arith.constant 0 : index
      %c0_12 = arith.constant 0 : index
      %14 = vector.load %arg9[%c0_11, %c0_12] : memref<8x1024xf32, #tpu.memory_space<vmem>>, vector<8x1024xf32>
      tpu.vector_store %arg9[%c0_11, %c0_12], %13 {strides = array<i32>} : memref<8x1024xf32, #tpu.memory_space<vmem>>, vector<8x1024xf32>,
    } else {
    }
    %c0 = arith.constant 0 : index
    %c0_1 = arith.constant 0 : index
    %3 = vector.load %arg9[%c0, %c0_1] : memref<8x1024xf32, #tpu.memory_space<vmem>>, vector<8x1024xf32>
    %c0_2 = arith.constant 0 : index
    %c0_3 = arith.constant 0 : index
    %4 = vector.load %arg1[%c0_2, %c0_3] : memref<8x256xf32, #tpu.memory_space<vmem>>, vector<8x256xf32>
    %5 = arith.truncf %4 : vector<8x256xf32> to vector<8x256xbf16>
    %c0_4 = arith.constant 0 : index
    %c0_5 = arith.constant 0 : index
    %6 = vector.load %arg2[%c0_4, %c0_5] : memref<256x1024xbf16, #tpu.memory_space<vmem>>, vector<256x1024xbf16>
    %cst = arith.constant dense<0.000000e+00> : vector<8x1024xf32>
    %7 = tpu.matmul %5, %6, %cst {dimension_numbers = #tpu.dot_dimension_numbers<[1], [0], [0], [1], [0, 0, 1, 1], [], []>} : vector<8x256xbf16>, vector<256x1024xbf16>, vector<8x1024xf32> -> vector<8x1024xf32>
    %8 = arith.addf %3, %7 : vector<8x1024xf32>
    %c0_6 = arith.constant 0 : index
    %c0_7 = arith.constant 0 : index
    %9 = vector.load %arg9[%c0_6, %c0_7] : memref<8x1024xf32, #tpu.memory_space<vmem>>, vector<8x1024xf32>
    tpu.vector_store %arg9[%c0_6, %c0_7], %8 {strides = array<i32>} : memref<8x1024xf32, #tpu.memory_space<vmem>>, vector<8x1024xf32>,
    %c0_i32_8 = arith.constant 0 : i32
    %10 = arith.cmpi eq, %arg0, %c0_i32_8 : i32
    %11 = arith.extui %10 : i1 to i32
    %c0_i32_9 = arith.constant 0 : i32
    %12 = arith.cmpi ne, %11, %c0_i32_9 : i32
    scf.if %12 {
      %c0_10 = arith.constant 0 : index
      %c0_11 = arith.constant 0 : index
      %13 = vector.load %arg9[%c0_10, %c0_11] : memref<8x1024xf32, #tpu.memory_space<vmem>>, vector<8x1024xf32>
      %c0_12 = arith.constant 0 : index
      %c0_13 = arith.constant 0 : index
      %14 = vector.load %arg3[%c0_12, %c0_13] : memref<1x1024xf32, #tpu.memory_space<vmem>>, vector<1x1024xf32>
      %15 = vector.broadcast %14 : vector<1x1024xf32> to vector<8x1024xf32>
      %16 = arith.addf %13, %15 : vector<8x1024xf32>
      %cst_14 = arith.constant 0.000000e+00 : f32
      %17 = vector.broadcast %cst_14 : f32 to vector<8x1024xf32>
      %18 = arith.maximumf %16, %17 : vector<8x1024xf32>
      %19 = arith.truncf %18 : vector<8x1024xf32> to vector<8x1024xbf16>
      %c0_15 = arith.constant 0 : index
      %c0_16 = arith.constant 0 : index
      %20 = vector.load %arg4[%c0_15, %c0_16] : memref<1024x256xbf16, #tpu.memory_space<vmem>>, vector<1024x256xbf16>
      %cst_17 = arith.constant dense<0.000000e+00> : vector<8x256xf32>
      %21 = tpu.matmul %19, %20, %cst_17 {dimension_numbers = #tpu.dot_dimension_numbers<[1], [0], [0], [1], [0, 0, 1, 1], [], []>} : vector<8x1024xbf16>, vector<1024x256xbf16>, vector<8x256xf32> -> vector<8x256xf32>
      %c0_18 = arith.constant 0 : index
      %c0_19 = arith.constant 0 : index
      %22 = vector.load %arg5[%c0_18, %c0_19] : memref<1x256xf32, #tpu.memory_space<vmem>>, vector<1x256xf32>
      %23 = vector.broadcast %22 : vector<1x256xf32> to vector<8x256xf32>
      %24 = arith.addf %21, %23 : vector<8x256xf32>
      %cst_20 = arith.constant 0.000000e+00 : f32
      %25 = vector.broadcast %cst_20 : f32 to vector<8x256xf32>
      %26 = arith.maximumf %24, %25 : vector<8x256xf32>
      %27 = arith.truncf %26 : vector<8x256xf32> to vector<8x256xbf16>
      %c0_21 = arith.constant 0 : index
      %c0_22 = arith.constant 0 : index
      %28 = vector.load %arg6[%c0_21, %c0_22] : memref<256x128xbf16, #tpu.memory_space<vmem>>, vector<256x128xbf16>
      %cst_23 = arith.constant dense<0.000000e+00> : vector<8x128xf32>
      %29 = tpu.matmul %27, %28, %cst_23 {dimension_numbers = #tpu.dot_dimension_numbers<[1], [0], [0], [1], [0, 0, 1, 1], [], []>} : vector<8x256xbf16>, vector<256x128xbf16>, vector<8x128xf32> -> vector<8x128xf32>
      %c0_24 = arith.constant 0 : index
      %c0_25 = arith.constant 0 : index
      %30 = vector.load %arg7[%c0_24, %c0_25] : memref<1x128xf32, #tpu.memory_space<vmem>>, vector<1x128xf32>
      %31 = vector.broadcast %30 : vector<1x128xf32> to vector<8x128xf32>
      %32 = arith.addf %29, %31 : vector<8x128xf32>
      %c0_26 = arith.constant 0 : index
      %c0_27 = arith.constant 0 : index
      %33 = vector.load %arg8[%c0_26, %c0_27] : memref<8x128xf32, #tpu.memory_space<vmem>>, vector<8x128xf32>
      tpu.vector_store %arg8[%c0_26, %c0_27], %32 {strides = array<i32>} : memref<8x128xf32, #tpu.memory_space<vmem>>, vector<8x128xf32>,
    } else {
    }
    return
  }
  func.func @transform_0(%arg0: i32) -> (i32, i32) {
    %c0_i32 = arith.constant 0 : i32
    %c0_i32_0 = arith.constant 0 : i32
    return %c0_i32, %arg0 : i32, i32
  }
  func.func @transform_1(%arg0: i32) -> (i32, i32) {
    %c0_i32 = arith.constant 0 : i32
    %c0_i32_0 = arith.constant 0 : i32
    return %arg0, %c0_i32 : i32, i32
  }
  func.func @transform_2(%arg0: i32) -> (i32, i32) {
    %c0_i32 = arith.constant 0 : i32
    %c0_i32_0 = arith.constant 0 : i32
    %c0_i32_1 = arith.constant 0 : i32
    return %c0_i32, %c0_i32_0 : i32, i32
  }
  func.func @transform_3(%arg0: i32) -> (i32, i32) {
    %c0_i32 = arith.constant 0 : i32
    %c0_i32_0 = arith.constant 0 : i32
    %c0_i32_1 = arith.constant 0 : i32
    return %c0_i32, %c0_i32_0 : i32, i32
  }
  func.func @transform_4(%arg0: i32) -> (i32, i32) {
    %c0_i32 = arith.constant 0 : i32
    %c0_i32_0 = arith.constant 0 : i32
    %c0_i32_1 = arith.constant 0 : i32
    return %c0_i32, %c0_i32_0 : i32, i32
  }
  func.func @transform_5(%arg0: i32) -> (i32, i32) {
    %c0_i32 = arith.constant 0 : i32
    %c0_i32_0 = arith.constant 0 : i32
    %c0_i32_1 = arith.constant 0 : i32
    return %c0_i32, %c0_i32_0 : i32, i32
  }
  func.func @transform_6(%arg0: i32) -> (i32, i32) {
    %c0_i32 = arith.constant 0 : i32
    %c0_i32_0 = arith.constant 0 : i32
    %c0_i32_1 = arith.constant 0 : i32
    return %c0_i32, %c0_i32_0 : i32, i32
  }
  func.func @transform_7(%arg0: i32) -> (i32, i32) {
    %c0_i32 = arith.constant 0 : i32
    %c0_i32_0 = arith.constant 0 : i32
    %c0_i32_1 = arith.constant 0 : i32
    return %c0_i32, %c0_i32_0 : i32, i32
  }
}

</mosaic_0001>

<llo_original>
// kernel: _forward_jit.1
$region0: #{_forward_jit.1}
  #allocation0 [shape = 'u32[]', space=smem, size = 0x4, offset = 0x4, fixed_abs, tag = 'smem constant byte address 0x4 - core index']
  #allocation1 [shape = 'u32[144,128]{1,0:T(1,128)}', space=vmem, size = 0x12000, scoped, tag = 'internal scratch']
  #allocation2 [shape = 'f32[8,1024]{1,0:T(8,128)}', space=vmem, size = 0x8000, scoped, tag = 'scratch operand']
  %s0 = inlined_call_operand.hbm [shape: f32[8,256], index: 0, kind: input, shape index: {}]
  %s1 = inlined_call_operand.hbm [shape: bf16[256,1024], index: 1, kind: input, shape index: {}]
  %s2 = inlined_call_operand.hbm [shape: f32[1,1024], index: 2, kind: input, shape index: {}]
  %s3 = inlined_call_operand.hbm [shape: bf16[1024,256], index: 3, kind: input, shape index: {}]
  %s4 = inlined_call_operand.vmem [shape: f32[1,256], index: 4, kind: input, shape index: {}]
  %s5 = inlined_call_operand.hbm [shape: bf16[256,128], index: 5, kind: input, shape index: {}]
  %s6 = inlined_call_operand.vmem [shape: f32[1,128], index: 6, kind: input, shape index: {}]
  %s7 = inlined_call_operand.hbm [shape: f32[8,128], index: 7, kind: output, shape index: {}]
  %s8 = sld [smem:[#allocation0]]
  $region66: #{_forward_jit.1} parent=0
    _
  %s10 = ssub.s32 1, %s8
  %s11 = scalar_select 0, %s10, %s8
  $region1: #{_forward_jit.1} parent=0
    #allocation3 [shape = 'u8[8192]{0}', space=vmem, size = 0x2000, scoped, tag = 'input window, operand 0, single buffered']
    #allocation4 [shape = 's32[1]{0}', space=sflag, size = 0x4, scoped, tag = 'scoped memory for _forward_jit.1']
    #allocation5 [shape = 's32[1]{0}', space=sflag, size = 0x4, scoped, tag = 'scoped memory for _forward_jit.1']
    #allocation6 [shape = 'u8[524288]{0}', space=vmem, size = 0x80000, scoped, tag = 'input window, operand 1, single buffered']
    #allocation7 [shape = 's32[1]{0}', space=sflag, size = 0x4, scoped, tag = 'scoped memory for _forward_jit.1']
    #allocation8 [shape = 'u8[4096]{0}', space=vmem, size = 0x1000, scoped, tag = 'input window, operand 2, single buffered']
    #allocation9 [shape = 'u8[524288]{0}', space=vmem, size = 0x80000, scoped, tag = 'input window, operand 3, single buffered']
    #allocation10 [shape = 's32[1]{0}', space=sflag, size = 0x4, scoped, tag = 'scoped memory for _forward_jit.1']
    #allocation11 [shape = 'u8[65536]{0}', space=vmem, size = 0x10000, scoped, tag = 'input window, operand 5, single buffered']
    #allocation12 [shape = 'u8[4096]{0}', space=vmem, size = 0x1000, scoped, tag = 'output window, operand 0, single buffered']
    %12 = vsyncpa [#allocation4], 0
    %13 = vsyncpa [#allocation7], 0
    %14 = vsyncpa [#allocation10], 0
    %15 = vsyncpa [#allocation5], 0
    // Predicated region
    $region2: #{_forward_jit.1} parent=1 // pred_check
      _
    $region3: #{_forward_jit.1} parent=1 // pred_check_branch
      %17 = sbr.rel (0) target = $region5
    $region4: #{_forward_jit.1} parent=1 // pred_region
      %s19 = ssub.s32 256, 256
      %20 = vsyncadd [#allocation4], %s19
      %s22 = sshll.u32 [#allocation3], 4
      %s23 = int_to_ptr.vmem [resolvable:$true] %s22
      %25 = dma.hbm_to_vmem [thread:$0]  %s0, 256, %s23, [#allocation4]
    $region5: #{_forward_jit.1} parent=1 // pred_fallthru
      _
    // Predicated region
    $region6: #{_forward_jit.1} parent=1 // pred_check
      _
    $region7: #{_forward_jit.1} parent=1 // pred_check_branch
      %27 = sbr.rel (0) target = $region9
    $region8: #{_forward_jit.1} parent=1 // pred_region
      %s29 = ssub.s32 16384, 16384
      %30 = vsyncadd [#allocation7], %s29
      %s31 = sshll.u32 [#allocation6], 4
      %s32 = int_to_ptr.vmem [resolvable:$true] %s31
      %37 = dma.hbm_to_vmem [thread:$0]  %s1, 16384, %s32, [#allocation7], 512, 512, 32
    $region9: #{_forward_jit.1} parent=1 // pred_fallthru
      _
    // Predicated region
    $region10: #{_forward_jit.1} parent=1 // pred_check
      _
    $region11: #{_forward_jit.1} parent=1 // pred_check_branch
      %39 = sbr.rel (0) target = $region13
    $region12: #{_forward_jit.1} parent=1 // pred_region
      %s41 = ssub.s32 128, 128
      %42 = vsyncadd [#allocation7], %s41
      %s44 = sshll.u32 [#allocation8], 4
      %s45 = int_to_ptr.vmem [resolvable:$true] %s44
      %47 = dma.hbm_to_vmem [thread:$0]  %s2, 128, %s45, [#allocation7]
    $region13: #{_forward_jit.1} parent=1 // pred_fallthru
      _
    // Predicated region
    $region14: #{_forward_jit.1} parent=1 // pred_check
      _
    $region15: #{_forward_jit.1} parent=1 // pred_check_branch
      %49 = sbr.rel (0) target = $region17
    $region16: #{_forward_jit.1} parent=1 // pred_region
      %s51 = ssub.s32 16384, 16384
      %52 = vsyncadd [#allocation10], %s51
      %s53 = sshll.u32 [#allocation9], 4
      %s54 = int_to_ptr.vmem [resolvable:$true] %s53
      %59 = dma.hbm_to_vmem [thread:$0]  %s3, 16384, %s54, [#allocation10], 128, 128, 8
    $region17: #{_forward_jit.1} parent=1 // pred_fallthru
      _
    // Predicated region
    $region18: #{_forward_jit.1} parent=1 // pred_check
      _
    $region19: #{_forward_jit.1} parent=1 // pred_check_branch
      %61 = sbr.rel (0) target = $region21
    $region20: #{_forward_jit.1} parent=1 // pred_region
      _
    $region21: #{_forward_jit.1} parent=1 // pred_fallthru
      _
    // Predicated region
    $region22: #{_forward_jit.1} parent=1 // pred_check
      _
    $region23: #{_forward_jit.1} parent=1 // pred_check_branch
      %63 = sbr.rel (0) target = $region25
    $region24: #{_forward_jit.1} parent=1 // pred_region
      %s65 = ssub.s32 2048, 2048
      %66 = vsyncadd [#allocation10], %s65
      %s67 = sshll.u32 [#allocation11], 4
      %s68 = int_to_ptr.vmem [resolvable:$true] %s67
      %73 = dma.hbm_to_vmem [thread:$0]  %s5, 2048, %s68, [#allocation10], 64, 64, 4
    $region25: #{_forward_jit.1} parent=1 // pred_fallthru
      _
    // Predicated region
    $region26: #{_forward_jit.1} parent=1 // pred_check
      _
    $region27: #{_forward_jit.1} parent=1 // pred_check_branch
      %75 = sbr.rel (0) target = $region29
    $region28: #{_forward_jit.1} parent=1 // pred_region
      _
    $region29: #{_forward_jit.1} parent=1 // pred_fallthru
      _
    // Predicated region
    $region30: #{_forward_jit.1} parent=1 // pred_check
      _
    $region31: #{_forward_jit.1} parent=1 // pred_check_branch
      %77 = sbr.rel (0) target = $region33
    $region32: #{_forward_jit.1} parent=1 // pred_region
      %78 = dma.done [#allocation4], 256
    $region33: #{_forward_jit.1} parent=1 // pred_fallthru
      _
    // Predicated region
    $region34: #{_forward_jit.1} parent=1 // pred_check
      _
    $region35: #{_forward_jit.1} parent=1 // pred_check_branch
      %80 = sbr.rel (0) target = $region37
    $region36: #{_forward_jit.1} parent=1 // pred_region
      %81 = dma.done [#allocation7], 16384
    $region37: #{_forward_jit.1} parent=1 // pred_fallthru
      _
    // Predicated region
    $region38: #{_forward_jit.1} parent=1 // pred_check
      _
    $region39: #{_forward_jit.1} parent=1 // pred_check_branch
      %83 = sbr.rel (0) target = $region41
    $region40: #{_forward_jit.1} parent=1 // pred_region
      %84 = dma.done [#allocation7], 128
    $region41: #{_forward_jit.1} parent=1 // pred_fallthru
      _
    // Predicated region
    $region42: #{_forward_jit.1} parent=1 // pred_check
      _
    $region43: #{_forward_jit.1} parent=1 // pred_check_branch
      %86 = sbr.rel (0) target = $region45
    $region44: #{_forward_jit.1} parent=1 // pred_region
      %87 = dma.done [#allocation10], 16384
    $region45: #{_forward_jit.1} parent=1 // pred_fallthru
      _
    // Predicated region
    $region46: #{_forward_jit.1} parent=1 // pred_check
      _
    $region47: #{_forward_jit.1} parent=1 // pred_check_branch
      %89 = sbr.rel (0) target = $region49
    $region48: #{_forward_jit.1} parent=1 // pred_region
      %90 = dma.done [#allocation10], 2048
    $region49: #{_forward_jit.1} parent=1 // pred_fallthru
      _
    %p92 = scmp.eq.s32.totalorder 0, 0
    // Predicated region
    $region50: #{_forward_jit.1} parent=1 // pred_check
      %p93 = pneg %p92
    $region51: #{_forward_jit.1} parent=1 // pred_check_branch
      %95 = sbr.rel (%p93) target = $region53
    $region52: #{_forward_jit.1} parent=1 // pred_region
      %96 = vst [vmem:[#allocation2] sm:$0xff] 0.0
      %97 = vst [vmem:[#allocation2 + $0x8] sm:$0xff] 0.0
      %98 = vst [vmem:[#allocation2 + $0x10] sm:$0xff] 0.0
      %99 = vst [vmem:[#allocation2 + $0x18] sm:$0xff] 0.0
      %100 = vst [vmem:[#allocation2 + $0x20] sm:$0xff] 0.0
      %101 = vst [vmem:[#allocation2 + $0x28] sm:$0xff] 0.0
      %102 = vst [vmem:[#allocation2 + $0x30] sm:$0xff] 0.0
      %103 = vst [vmem:[#allocation2 + $0x38] sm:$0xff] 0.0
    $region53: #{_forward_jit.1} parent=1 // pred_fallthru
      _
    %v104 = vld [vmem:[#allocation2] sm:$0xff]
    %v105 = vld [vmem:[#allocation2 + $0x8] sm:$0xff]
    %v106 = vld [vmem:[#allocation2 + $0x10] sm:$0xff]
    %v107 = vld [vmem:[#allocation2 + $0x18] sm:$0xff]
    %v108 = vld [vmem:[#allocation2 + $0x20] sm:$0xff]
    %v109 = vld [vmem:[#allocation2 + $0x28] sm:$0xff]
    %v110 = vld [vmem:[#allocation2 + $0x30] sm:$0xff]
    %v111 = vld [vmem:[#allocation2 + $0x38] sm:$0xff]
    %v112 = vld [vmem:[#allocation3] sm:$0xff]
    %v113 = vld [vmem:[#allocation3 + $0x8] sm:$0xff]
    %v114 = vpack.c.bf16 %v112, %v112
    %v115 = vpack.c.bf16 %v113, %v113
    %v116 = vld [vmem:[#allocation6] sm:$0xff]
    %v117 = vld [vmem:[#allocation6 + $0x8] sm:$0xff]
    %v118 = vld [vmem:[#allocation6 + $0x10] sm:$0xff]
    %v119 = vld [vmem:[#allocation6 + $0x18] sm:$0xff]
    %v120 = vld [vmem:[#allocation6 + $0x20] sm:$0xff]
    %v121 = vld [vmem:[#allocation6 + $0x28] sm:$0xff]
    %v122 = vld [vmem:[#allocation6 + $0x30] sm:$0xff]
    %v123 = vld [vmem:[#allocation6 + $0x38] sm:$0xff]
    %v124 = vld [vmem:[#allocation6 + $0x40] sm:$0xff]
    %v125 = vld [vmem:[#allocation6 + $0x48] sm:$0xff]
    %v126 = vld [vmem:[#allocation6 + $0x50] sm:$0xff]
    %v127 = vld [vmem:[#allocation6 + $0x58] sm:$0xff]
    %v128 = vld [vmem:[#allocation6 + $0x60] sm:$0xff]
    %v129 = vld [vmem:[#allocation6 + $0x68] sm:$0xff]
    %v130 = vld [vmem:[#allocation6 + $0x70] sm:$0xff]
    %v131 = vld [vmem:[#allocation6 + $0x78] sm:$0xff]
    %v132 = vld [vmem:[#allocation6 + $0x80] sm:$0xff]
    %v133 = vld [vmem:[#allocation6 + $0x88] sm:$0xff]
    %v134 = vld [vmem:[#allocation6 + $0x90] sm:$0xff]
    %v135 = vld [vmem:[#allocation6 + $0x98] sm:$0xff]
    %v136 = vld [vmem:[#allocation6 + $0xa0] sm:$0xff]
    %v137 = vld [vmem:[#allocation6 + $0xa8] sm:$0xff]
    %v138 = vld [vmem:[#allocation6 + $0xb0] sm:$0xff]
    %v139 = vld [vmem:[#allocation6 + $0xb8] sm:$0xff]
    %v140 = vld [vmem:[#allocation6 + $0xc0] sm:$0xff]
    %v141 = vld [vmem:[#allocation6 + $0xc8] sm:$0xff]
    %v142 = vld [vmem:[#allocation6 + $0xd0] sm:$0xff]
    %v143 = vld [vmem:[#allocation6 + $0xd8] sm:$0xff]
    %v144 = vld [vmem:[#allocation6 + $0xe0] sm:$0xff]
    %v145 = vld [vmem:[#allocation6 + $0xe8] sm:$0xff]
    %v146 = vld [vmem:[#allocation6 + $0xf0] sm:$0xff]
    %v147 = vld [vmem:[#allocation6 + $0xf8] sm:$0xff]
    %v148 = vld [vmem:[#allocation6 + $0x100] sm:$0xff]
    %v149 = vld [vmem:[#allocation6 + $0x108] sm:$0xff]
    %v150 = vld [vmem:[#allocation6 + $0x110] sm:$0xff]
    %v151 = vld [vmem:[#allocation6 + $0x118] sm:$0xff]
    %v152 = vld [vmem:[#allocation6 + $0x120] sm:$0xff]
    %v153 = vld [vmem:[#allocation6 + $0x128] sm:$0xff]
    %v154 = vld [vmem:[#allocation6 + $0x130] sm:$0xff]
    %v155 = vld [vmem:[#allocation6 + $0x138] sm:$0xff]
    %v156 = vld [vmem:[#allocation6 + $0x140] sm:$0xff]
    %v157 = vld [vmem:[#allocation6 + $0x148] sm:$0xff]
    %v158 = vld [vmem:[#allocation6 + $0x150] sm:$0xff]
    %v159 = vld [vmem:[#allocation6 + $0x158] sm:$0xff]
    %v160 = vld [vmem:[#allocation6 + $0x160] sm:$0xff]
    %v161 = vld [vmem:[#allocation6 + $0x168] sm:$0xff]
    %v162 = vld [vmem:[#allocation6 + $0x170] sm:$0xff]
    %v163 = vld [vmem:[#allocation6 + $0x178] sm:$0xff]
    %v164 = vld [vmem:[#allocation6 + $0x180] sm:$0xff]
    %v165 = vld [vmem:[#allocation6 + $0x188] sm:$0xff]
    %v166 = vld [vmem:[#allocation6 + $0x190] sm:$0xff]
    %v167 = vld [vmem:[#allocation6 + $0x198] sm:$0xff]
    %v168 = vld [vmem:[#allocation6 + $0x1a0] sm:$0xff]
    %v169 = vld [vmem:[#allocation6 + $0x1a8] sm:$0xff]
    %v170 = vld [vmem:[#allocation6 + $0x1b0] sm:$0xff]
    %v171 = vld [vmem:[#allocation6 + $0x1b8] sm:$0xff]
    %v172 = vld [vmem:[#allocation6 + $0x1c0] sm:$0xff]
    %v173 = vld [vmem:[#allocation6 + $0x1c8] sm:$0xff]
    %v174 = vld [vmem:[#allocation6 + $0x1d0] sm:$0xff]
    %v175 = vld [vmem:[#allocation6 + $0x1d8] sm:$0xff]
    %v176 = vld [vmem:[#allocation6 + $0x1e0] sm:$0xff]
    %v177 = vld [vmem:[#allocation6 + $0x1e8] sm:$0xff]
    %v178 = vld [vmem:[#allocation6 + $0x1f0] sm:$0xff]
    %v179 = vld [vmem:[#allocation6 + $0x1f8] sm:$0xff]
    %v180 = vld [vmem:[#allocation6 + $0x200] sm:$0xff]
    %v181 = vld [vmem:[#allocation6 + $0x208] sm:$0xff]
    %v182 = vld [vmem:[#allocation6 + $0x210] sm:$0xff]
    %v183 = vld [vmem:[#allocation6 + $0x218] sm:$0xff]
    %v184 = vld [vmem:[#allocation6 + $0x220] sm:$0xff]
    %v185 = vld [vmem:[#allocation6 + $0x228] sm:$0xff]
    %v186 = vld [vmem:[#allocation6 + $0x230] sm:$0xff]
    %v187 = vld [vmem:[#allocation6 + $0x238] sm:$0xff]
    %v188 = vld [vmem:[#allocation6 + $0x240] sm:$0xff]
    %v189 = vld [vmem:[#allocation6 + $0x248] sm:$0xff]
    %v190 = vld [vmem:[#allocation6 + $0x250] sm:$0xff]
    %v191 = vld [vmem:[#allocation6 + $0x258] sm:$0xff]
    %v192 = vld [vmem:[#allocation6 + $0x260] sm:$0xff]
    %v193 = vld [vmem:[#allocation6 + $0x268] sm:$0xff]
    %v194 = vld [vmem:[#allocation6 + $0x270] sm:$0xff]
    %v195 = vld [vmem:[#allocation6 + $0x278] sm:$0xff]
    %v196 = vld [vmem:[#allocation6 + $0x280] sm:$0xff]
    %v197 = vld [vmem:[#allocation6 + $0x288] sm:$0xff]
    %v198 = vld [vmem:[#allocation6 + $0x290] sm:$0xff]
    %v199 = vld [vmem:[#allocation6 + $0x298] sm:$0xff]
    %v200 = vld [vmem:[#allocation6 + $0x2a0] sm:$0xff]
    %v201 = vld [vmem:[#allocation6 + $0x2a8] sm:$0xff]
    %v202 = vld [vmem:[#allocation6 + $0x2b0] sm:$0xff]
    %v203 = vld [vmem:[#allocation6 + $0x2b8] sm:$0xff]
    %v204 = vld [vmem:[#allocation6 + $0x2c0] sm:$0xff]
    %v205 = vld [vmem:[#allocation6 + $0x2c8] sm:$0xff]
    %v206 = vld [vmem:[#allocation6 + $0x2d0] sm:$0xff]
    %v207 = vld [vmem:[#allocation6 + $0x2d8] sm:$0xff]
    %v208 = vld [vmem:[#allocation6 + $0x2e0] sm:$0xff]
    %v209 = vld [vmem:[#allocation6 + $0x2e8] sm:$0xff]
    %v210 = vld [vmem:[#allocation6 + $0x2f0] sm:$0xff]
    %v211 = vld [vmem:[#allocation6 + $0x2f8] sm:$0xff]
    %v212 = vld [vmem:[#allocation6 + $0x300] sm:$0xff]
    %v213 = vld [vmem:[#allocation6 + $0x308] sm:$0xff]
    %v214 = vld [vmem:[#allocation6 + $0x310] sm:$0xff]
    %v215 = vld [vmem:[#allocation6 + $0x318] sm:$0xff]
    %v216 = vld [vmem:[#allocation6 + $0x320] sm:$0xff]
    %v217 = vld [vmem:[#allocation6 + $0x328] sm:$0xff]
    %v218 = vld [vmem:[#allocation6 + $0x330] sm:$0xff]
    %v219 = vld [vmem:[#allocation6 + $0x338] sm:$0xff]
    %v220 = vld [vmem:[#allocation6 + $0x340] sm:$0xff]
    %v221 = vld [vmem:[#allocation6 + $0x348] sm:$0xff]
    %v222 = vld [vmem:[#allocation6 + $0x350] sm:$0xff]
    %v223 = vld [vmem:[#allocation6 + $0x358] sm:$0xff]
    %v224 = vld [vmem:[#allocation6 + $0x360] sm:$0xff]
    %v225 = vld [vmem:[#allocation6 + $0x368] sm:$0xff]
    %v226 = vld [vmem:[#allocation6 + $0x370] sm:$0xff]
    %v227 = vld [vmem:[#allocation6 + $0x378] sm:$0xff]
    %v228 = vld [vmem:[#allocation6 + $0x380] sm:$0xff]
    %v229 = vld [vmem:[#allocation6 + $0x388] sm:$0xff]
    %v230 = vld [vmem:[#allocation6 + $0x390] sm:$0xff]
    %v231 = vld [vmem:[#allocation6 + $0x398] sm:$0xff]
    %v232 = vld [vmem:[#allocation6 + $0x3a0] sm:$0xff]
    %v233 = vld [vmem:[#allocation6 + $0x3a8] sm:$0xff]
    %v234 = vld [vmem:[#allocation6 + $0x3b0] sm:$0xff]
    %v235 = vld [vmem:[#allocation6 + $0x3b8] sm:$0xff]
    %v236 = vld [vmem:[#allocation6 + $0x3c0] sm:$0xff]
    %v237 = vld [vmem:[#allocation6 + $0x3c8] sm:$0xff]
    %v238 = vld [vmem:[#allocation6 + $0x3d0] sm:$0xff]
    %v239 = vld [vmem:[#allocation6 + $0x3d8] sm:$0xff]
    %v240 = vld [vmem:[#allocation6 + $0x3e0] sm:$0xff]
    %v241 = vld [vmem:[#allocation6 + $0x3e8] sm:$0xff]
    %v242 = vld [vmem:[#allocation6 + $0x3f0] sm:$0xff]
    %v243 = vld [vmem:[#allocation6 + $0x3f8] sm:$0xff]
    %v372 = vunpack.c.l.b16 %v116
    %v373 = vunpack.c.h.b16 %v116
    %v374 = vunpack.c.l.b16 %v117
    %v375 = vunpack.c.h.b16 %v117
    %v376 = vunpack.c.l.b16 %v118
    %v377 = vunpack.c.h.b16 %v118
    %v378 = vunpack.c.l.b16 %v119
    %v379 = vunpack.c.h.b16 %v119
    %v380 = vunpack.c.l.b16 %v120
    %v381 = vunpack.c.h.b16 %v120
    %v382 = vunpack.c.l.b16 %v121
    %v383 = vunpack.c.h.b16 %v121
    %v384 = vunpack.c.l.b16 %v122
    %v385 = vunpack.c.h.b16 %v122
    %v386 = vunpack.c.l.b16 %v123
    %v387 = vunpack.c.h.b16 %v123
    %v388 = vunpack.c.l.b16 %v124
    %v389 = vunpack.c.h.b16 %v124
    %v390 = vunpack.c.l.b16 %v125
    %v391 = vunpack.c.h.b16 %v125
    %v392 = vunpack.c.l.b16 %v126
    %v393 = vunpack.c.h.b16 %v126
    %v394 = vunpack.c.l.b16 %v127
    %v395 = vunpack.c.h.b16 %v127
    %v396 = vunpack.c.l.b16 %v128
    %v397 = vunpack.c.h.b16 %v128
    %v398 = vunpack.c.l.b16 %v129
    %v399 = vunpack.c.h.b16 %v129
    %v400 = vunpack.c.l.b16 %v130
    %v401 = vunpack.c.h.b16 %v130
    %v402 = vunpack.c.l.b16 %v131
    %v403 = vunpack.c.h.b16 %v131
    %v404 = vunpack.c.l.b16 %v132
    %v405 = vunpack.c.h.b16 %v132
    %v406 = vunpack.c.l.b16 %v133
    %v407 = vunpack.c.h.b16 %v133
    %v408 = vunpack.c.l.b16 %v134
    %v409 = vunpack.c.h.b16 %v134
    %v410 = vunpack.c.l.b16 %v135
    %v411 = vunpack.c.h.b16 %v135
    %v412 = vunpack.c.l.b16 %v136
    %v413 = vunpack.c.h.b16 %v136
    %v414 = vunpack.c.l.b16 %v137
    %v415 = vunpack.c.h.b16 %v137
    %v416 = vunpack.c.l.b16 %v138
    %v417 = vunpack.c.h.b16 %v138
    %v418 = vunpack.c.l.b16 %v139
    %v419 = vunpack.c.h.b16 %v139
    %v420 = vunpack.c.l.b16 %v140
    %v421 = vunpack.c.h.b16 %v140
    %v422 = vunpack.c.l.b16 %v141
    %v423 = vunpack.c.h.b16 %v141
    %v424 = vunpack.c.l.b16 %v142
    %v425 = vunpack.c.h.b16 %v142
    %v426 = vunpack.c.l.b16 %v143
    %v427 = vunpack.c.h.b16 %v143
    %v428 = vunpack.c.l.b16 %v144
    %v429 = vunpack.c.h.b16 %v144
    %v430 = vunpack.c.l.b16 %v145
    %v431 = vunpack.c.h.b16 %v145
    %v432 = vunpack.c.l.b16 %v146
    %v433 = vunpack.c.h.b16 %v146
    %v434 = vunpack.c.l.b16 %v147
    %v435 = vunpack.c.h.b16 %v147
    %v436 = vunpack.c.l.b16 %v148
    %v437 = vunpack.c.h.b16 %v148
    %v438 = vunpack.c.l.b16 %v149
    %v439 = vunpack.c.h.b16 %v149
    %v440 = vunpack.c.l.b16 %v150
    %v441 = vunpack.c.h.b16 %v150
    %v442 = vunpack.c.l.b16 %v151
    %v443 = vunpack.c.h.b16 %v151
    %v444 = vunpack.c.l.b16 %v152
    %v445 = vunpack.c.h.b16 %v152
    %v446 = vunpack.c.l.b16 %v153
    %v447 = vunpack.c.h.b16 %v153
    %v448 = vunpack.c.l.b16 %v154
    %v449 = vunpack.c.h.b16 %v154
    %v450 = vunpack.c.l.b16 %v155
    %v451 = vunpack.c.h.b16 %v155
    %v452 = vunpack.c.l.b16 %v156
    %v453 = vunpack.c.h.b16 %v156
    %v454 = vunpack.c.l.b16 %v157
    %v455 = vunpack.c.h.b16 %v157
    %v456 = vunpack.c.l.b16 %v158
    %v457 = vunpack.c.h.b16 %v158
    %v458 = vunpack.c.l.b16 %v159
    %v459 = vunpack.c.h.b16 %v159
    %v460 = vunpack.c.l.b16 %v160
    %v461 = vunpack.c.h.b16 %v160
    %v462 = vunpack.c.l.b16 %v161
    %v463 = vunpack.c.h.b16 %v161
    %v464 = vunpack.c.l.b16 %v162
    %v465 = vunpack.c.h.b16 %v162
    %v466 = vunpack.c.l.b16 %v163
    %v467 = vunpack.c.h.b16 %v163
    %v468 = vunpack.c.l.b16 %v164
    %v469 = vunpack.c.h.b16 %v164
    %v470 = vunpack.c.l.b16 %v165
    %v471 = vunpack.c.h.b16 %v165
    %v472 = vunpack.c.l.b16 %v166
    %v473 = vunpack.c.h.b16 %v166
    %v474 = vunpack.c.l.b16 %v167
    %v475 = vunpack.c.h.b16 %v167
    %v476 = vunpack.c.l.b16 %v168
    %v477 = vunpack.c.h.b16 %v168
    %v478 = vunpack.c.l.b16 %v169
    %v479 = vunpack.c.h.b16 %v169
    %v480 = vunpack.c.l.b16 %v170
    %v481 = vunpack.c.h.b16 %v170
    %v482 = vunpack.c.l.b16 %v171
    %v483 = vunpack.c.h.b16 %v171
    %v484 = vunpack.c.l.b16 %v172
    %v485 = vunpack.c.h.b16 %v172
    %v486 = vunpack.c.l.b16 %v173
    %v487 = vunpack.c.h.b16 %v173
    %v488 = vunpack.c.l.b16 %v174
    %v489 = vunpack.c.h.b16 %v174
    %v490 = vunpack.c.l.b16 %v175
    %v491 = vunpack.c.h.b16 %v175
    %v492 = vunpack.c.l.b16 %v176
    %v493 = vunpack.c.h.b16 %v176
    %v494 = vunpack.c.l.b16 %v177
    %v495 = vunpack.c.h.b16 %v177
    %v496 = vunpack.c.l.b16 %v178
    %v497 = vunpack.c.h.b16 %v178
    %v498 = vunpack.c.l.b16 %v179
    %v499 = vunpack.c.h.b16 %v179
    %v500 = vunpack.c.l.b16 %v180
    %v501 = vunpack.c.h.b16 %v180
    %v502 = vunpack.c.l.b16 %v181
    %v503 = vunpack.c.h.b16 %v181
    %v504 = vunpack.c.l.b16 %v182
    %v505 = vunpack.c.h.b16 %v182
    %v506 = vunpack.c.l.b16 %v183
    %v507 = vunpack.c.h.b16 %v183
    %v508 = vunpack.c.l.b16 %v184
    %v509 = vunpack.c.h.b16 %v184
    %v510 = vunpack.c.l.b16 %v185
    %v511 = vunpack.c.h.b16 %v185
    %v512 = vunpack.c.l.b16 %v186
    %v513 = vunpack.c.h.b16 %v186
    %v514 = vunpack.c.l.b16 %v187
    %v515 = vunpack.c.h.b16 %v187
    %v516 = vunpack.c.l.b16 %v188
    %v517 = vunpack.c.h.b16 %v188
    %v518 = vunpack.c.l.b16 %v189
    %v519 = vunpack.c.h.b16 %v189
    %v520 = vunpack.c.l.b16 %v190
    %v521 = vunpack.c.h.b16 %v190
    %v522 = vunpack.c.l.b16 %v191
    %v523 = vunpack.c.h.b16 %v191
    %v524 = vunpack.c.l.b16 %v192
    %v525 = vunpack.c.h.b16 %v192
    %v526 = vunpack.c.l.b16 %v193
    %v527 = vunpack.c.h.b16 %v193
    %v528 = vunpack.c.l.b16 %v194
    %v529 = vunpack.c.h.b16 %v194
    %v530 = vunpack.c.l.b16 %v195
    %v531 = vunpack.c.h.b16 %v195
    %v532 = vunpack.c.l.b16 %v196
    %v533 = vunpack.c.h.b16 %v196
    %v534 = vunpack.c.l.b16 %v197
    %v535 = vunpack.c.h.b16 %v197
    %v536 = vunpack.c.l.b16 %v198
    %v537 = vunpack.c.h.b16 %v198
    %v538 = vunpack.c.l.b16 %v199
    %v539 = vunpack.c.h.b16 %v199
    %v540 = vunpack.c.l.b16 %v200
    %v541 = vunpack.c.h.b16 %v200
    %v542 = vunpack.c.l.b16 %v201
    %v543 = vunpack.c.h.b16 %v201
    %v544 = vunpack.c.l.b16 %v202
    %v545 = vunpack.c.h.b16 %v202
    %v546 = vunpack.c.l.b16 %v203
    %v547 = vunpack.c.h.b16 %v203
    %v548 = vunpack.c.l.b16 %v204
    %v549 = vunpack.c.h.b16 %v204
    %v550 = vunpack.c.l.b16 %v205
    %v551 = vunpack.c.h.b16 %v205
    %v552 = vunpack.c.l.b16 %v206
    %v553 = vunpack.c.h.b16 %v206
    %v554 = vunpack.c.l.b16 %v207
    %v555 = vunpack.c.h.b16 %v207
    %v556 = vunpack.c.l.b16 %v208
    %v557 = vunpack.c.h.b16 %v208
    %v558 = vunpack.c.l.b16 %v209
    %v559 = vunpack.c.h.b16 %v209
    %v560 = vunpack.c.l.b16 %v210
    %v561 = vunpack.c.h.b16 %v210
    %v562 = vunpack.c.l.b16 %v211
    %v563 = vunpack.c.h.b16 %v211
    %v564 = vunpack.c.l.b16 %v212
    %v565 = vunpack.c.h.b16 %v212
    %v566 = vunpack.c.l.b16 %v213
    %v567 = vunpack.c.h.b16 %v213
    %v568 = vunpack.c.l.b16 %v214
    %v569 = vunpack.c.h.b16 %v214
    %v570 = vunpack.c.l.b16 %v215
    %v571 = vunpack.c.h.b16 %v215
    %v572 = vunpack.c.l.b16 %v216
    %v573 = vunpack.c.h.b16 %v216
    %v574 = vunpack.c.l.b16 %v217
    %v575 = vunpack.c.h.b16 %v217
    %v576 = vunpack.c.l.b16 %v218
    %v577 = vunpack.c.h.b16 %v218
    %v578 = vunpack.c.l.b16 %v219
    %v579 = vunpack.c.h.b16 %v219
    %v580 = vunpack.c.l.b16 %v220
    %v581 = vunpack.c.h.b16 %v220
    %v582 = vunpack.c.l.b16 %v221
    %v583 = vunpack.c.h.b16 %v221
    %v584 = vunpack.c.l.b16 %v222
    %v585 = vunpack.c.h.b16 %v222
    %v586 = vunpack.c.l.b16 %v223
    %v587 = vunpack.c.h.b16 %v223
    %v588 = vunpack.c.l.b16 %v224
    %v589 = vunpack.c.h.b16 %v224
    %v590 = vunpack.c.l.b16 %v225
    %v591 = vunpack.c.h.b16 %v225
    %v592 = vunpack.c.l.b16 %v226
    %v593 = vunpack.c.h.b16 %v226
    %v594 = vunpack.c.l.b16 %v227
    %v595 = vunpack.c.h.b16 %v227
    %v596 = vunpack.c.l.b16 %v228
    %v597 = vunpack.c.h.b16 %v228
    %v598 = vunpack.c.l.b16 %v229
    %v599 = vunpack.c.h.b16 %v229
    %v600 = vunpack.c.l.b16 %v230
    %v601 = vunpack.c.h.b16 %v230
    %v602 = vunpack.c.l.b16 %v231
    %v603 = vunpack.c.h.b16 %v231
    %v604 = vunpack.c.l.b16 %v232
    %v605 = vunpack.c.h.b16 %v232
    %v606 = vunpack.c.l.b16 %v233
    %v607 = vunpack.c.h.b16 %v233
    %v608 = vunpack.c.l.b16 %v234
    %v609 = vunpack.c.h.b16 %v234
    %v610 = vunpack.c.l.b16 %v235
    %v611 = vunpack.c.h.b16 %v235
    %v612 = vunpack.c.l.b16 %v236
    %v613 = vunpack.c.h.b16 %v236
    %v614 = vunpack.c.l.b16 %v237
    %v615 = vunpack.c.h.b16 %v237
    %v616 = vunpack.c.l.b16 %v238
    %v617 = vunpack.c.h.b16 %v238
    %v618 = vunpack.c.l.b16 %v239
    %v619 = vunpack.c.h.b16 %v239
    %v620 = vunpack.c.l.b16 %v240
    %v621 = vunpack.c.h.b16 %v240
    %v622 = vunpack.c.l.b16 %v241
    %v623 = vunpack.c.h.b16 %v241
    %v624 = vunpack.c.l.b16 %v242
    %v625 = vunpack.c.h.b16 %v242
    %v626 = vunpack.c.l.b16 %v243
    %v627 = vunpack.c.h.b16 %v243
    %v628 = vpack.c.b16 %v380, %v372
    %v629 = vpack.c.b16 %v381, %v373
    %v630 = vpack.c.b16 %v382, %v374
    %v631 = vpack.c.b16 %v383, %v375
    %v632 = vpack.c.b16 %v384, %v376
    %v633 = vpack.c.b16 %v385, %v377
    %v634 = vpack.c.b16 %v386, %v378
    %v635 = vpack.c.b16 %v387, %v379
    %v636 = vpack.c.b16 %v396, %v388
    %v637 = vpack.c.b16 %v397, %v389
    %v638 = vpack.c.b16 %v398, %v390
    %v639 = vpack.c.b16 %v399, %v391
    %v640 = vpack.c.b16 %v400, %v392
    %v641 = vpack.c.b16 %v401, %v393
    %v642 = vpack.c.b16 %v402, %v394
    %v643 = vpack.c.b16 %v403, %v395
    %v644 = vpack.c.b16 %v412, %v404
    %v645 = vpack.c.b16 %v413, %v405
    %v646 = vpack.c.b16 %v414, %v406
    %v647 = vpack.c.b16 %v415, %v407
    %v648 = vpack.c.b16 %v416, %v408
    %v649 = vpack.c.b16 %v417, %v409
    %v650 = vpack.c.b16 %v418, %v410
    %v651 = vpack.c.b16 %v419, %v411
    %v652 = vpack.c.b16 %v428, %v420
    %v653 = vpack.c.b16 %v429, %v421
    %v654 = vpack.c.b16 %v430, %v422
    %v655 = vpack.c.b16 %v431, %v423
    %v656 = vpack.c.b16 %v432, %v424
    %v657 = vpack.c.b16 %v433, %v425
    %v658 = vpack.c.b16 %v434, %v426
    %v659 = vpack.c.b16 %v435, %v427
    %v660 = vpack.c.b16 %v444, %v436
    %v661 = vpack.c.b16 %v445, %v437
    %v662 = vpack.c.b16 %v446, %v438
    %v663 = vpack.c.b16 %v447, %v439
    %v664 = vpack.c.b16 %v448, %v440
    %v665 = vpack.c.b16 %v449, %v441
    %v666 = vpack.c.b16 %v450, %v442
    %v667 = vpack.c.b16 %v451, %v443
    %v668 = vpack.c.b16 %v460, %v452
    %v669 = vpack.c.b16 %v461, %v453
    %v670 = vpack.c.b16 %v462, %v454
    %v671 = vpack.c.b16 %v463, %v455
    %v672 = vpack.c.b16 %v464, %v456
    %v673 = vpack.c.b16 %v465, %v457
    %v674 = vpack.c.b16 %v466, %v458
    %v675 = vpack.c.b16 %v467, %v459
    %v676 = vpack.c.b16 %v476, %v468
    %v677 = vpack.c.b16 %v477, %v469
    %v678 = vpack.c.b16 %v478, %v470
    %v679 = vpack.c.b16 %v479, %v471
    %v680 = vpack.c.b16 %v480, %v472
    %v681 = vpack.c.b16 %v481, %v473
    %v682 = vpack.c.b16 %v482, %v474
    %v683 = vpack.c.b16 %v483, %v475
    %v684 = vpack.c.b16 %v492, %v484
    %v685 = vpack.c.b16 %v493, %v485
    %v686 = vpack.c.b16 %v494, %v486
    %v687 = vpack.c.b16 %v495, %v487
    %v688 = vpack.c.b16 %v496, %v488
    %v689 = vpack.c.b16 %v497, %v489
    %v690 = vpack.c.b16 %v498, %v490
    %v691 = vpack.c.b16 %v499, %v491
    %v692 = vpack.c.b16 %v508, %v500
    %v693 = vpack.c.b16 %v509, %v501
    %v694 = vpack.c.b16 %v510, %v502
    %v695 = vpack.c.b16 %v511, %v503
    %v696 = vpack.c.b16 %v512, %v504
    %v697 = vpack.c.b16 %v513, %v505
    %v698 = vpack.c.b16 %v514, %v506
    %v699 = vpack.c.b16 %v515, %v507
    %v700 = vpack.c.b16 %v524, %v516
    %v701 = vpack.c.b16 %v525, %v517
    %v702 = vpack.c.b16 %v526, %v518
    %v703 = vpack.c.b16 %v527, %v519
    %v704 = vpack.c.b16 %v528, %v520
    %v705 = vpack.c.b16 %v529, %v521
    %v706 = vpack.c.b16 %v530, %v522
    %v707 = vpack.c.b16 %v531, %v523
    %v708 = vpack.c.b16 %v540, %v532
    %v709 = vpack.c.b16 %v541, %v533
    %v710 = vpack.c.b16 %v542, %v534
    %v711 = vpack.c.b16 %v543, %v535
    %v712 = vpack.c.b16 %v544, %v536
    %v713 = vpack.c.b16 %v545, %v537
    %v714 = vpack.c.b16 %v546, %v538
    %v715 = vpack.c.b16 %v547, %v539
    %v716 = vpack.c.b16 %v556, %v548
    %v717 = vpack.c.b16 %v557, %v549
    %v718 = vpack.c.b16 %v558, %v550
    %v719 = vpack.c.b16 %v559, %v551
    %v720 = vpack.c.b16 %v560, %v552
    %v721 = vpack.c.b16 %v561, %v553
    %v722 = vpack.c.b16 %v562, %v554
    %v723 = vpack.c.b16 %v563, %v555
    %v724 = vpack.c.b16 %v572, %v564
    %v725 = vpack.c.b16 %v573, %v565
    %v726 = vpack.c.b16 %v574, %v566
    %v727 = vpack.c.b16 %v575, %v567
    %v728 = vpack.c.b16 %v576, %v568
    %v729 = vpack.c.b16 %v577, %v569
    %v730 = vpack.c.b16 %v578, %v570
    %v731 = vpack.c.b16 %v579, %v571
    %v732 = vpack.c.b16 %v588, %v580
    %v733 = vpack.c.b16 %v589, %v581
    %v734 = vpack.c.b16 %v590, %v582
    %v735 = vpack.c.b16 %v591, %v583
    %v736 = vpack.c.b16 %v592, %v584
    %v737 = vpack.c.b16 %v593, %v585
    %v738 = vpack.c.b16 %v594, %v586
    %v739 = vpack.c.b16 %v595, %v587
    %v740 = vpack.c.b16 %v604, %v596
    %v741 = vpack.c.b16 %v605, %v597
    %v742 = vpack.c.b16 %v606, %v598
    %v743 = vpack.c.b16 %v607, %v599
    %v744 = vpack.c.b16 %v608, %v600
    %v745 = vpack.c.b16 %v609, %v601
    %v746 = vpack.c.b16 %v610, %v602
    %v747 = vpack.c.b16 %v611, %v603
    %v748 = vpack.c.b16 %v620, %v612
    %v749 = vpack.c.b16 %v621, %v613
    %v750 = vpack.c.b16 %v622, %v614
    %v751 = vpack.c.b16 %v623, %v615
    %v752 = vpack.c.b16 %v624, %v616
    %v753 = vpack.c.b16 %v625, %v617
    %v754 = vpack.c.b16 %v626, %v618
    %v755 = vpack.c.b16 %v627, %v619
    %884 = vmatprep.subr.bf16.mxu0 %v629
    %885 = vmatpush1.bf16.msra.mxu0 %v628
    %886 = vmatprep.subr.bf16.mxu0 %v637
    %887 = vmatpush1.bf16.msra.mxu0 %v636
    %888 = vmatprep.subr.bf16.mxu0 %v645
    %889 = vmatpush1.bf16.msra.mxu0 %v644
    %890 = vmatprep.subr.bf16.mxu0 %v653
    %891 = vmatpush1.bf16.msra.mxu0 %v652
    %892 = vmatprep.subr.bf16.mxu0 %v661
    %893 = vmatpush1.bf16.msra.mxu0 %v660
    %894 = vmatprep.subr.bf16.mxu0 %v669
    %895 = vmatpush1.bf16.msra.mxu0 %v668
    %896 = vmatprep.subr.bf16.mxu0 %v677
    %897 = vmatpush1.bf16.msra.mxu0 %v676
    %898 = vmatprep.subr.bf16.mxu0 %v685
    %899 = vmatpush1.bf16.msra.mxu0 %v684
    %900 = vmatprep.subr.bf16.mxu0 %v693
    %901 = vmatpush1.bf16.msra.mxu0 %v692
    %902 = vmatprep.subr.bf16.mxu0 %v701
    %903 = vmatpush1.bf16.msra.mxu0 %v700
    %904 = vmatprep.subr.bf16.mxu0 %v709
    %905 = vmatpush1.bf16.msra.mxu0 %v708
    %906 = vmatprep.subr.bf16.mxu0 %v717
    %907 = vmatpush1.bf16.msra.mxu0 %v716
    %908 = vmatprep.subr.bf16.mxu0 %v725
    %909 = vmatpush1.bf16.msra.mxu0 %v724
    %910 = vmatprep.subr.bf16.mxu0 %v733
    %911 = vmatpush1.bf16.msra.mxu0 %v732
    %912 = vmatprep.subr.bf16.mxu0 %v741
    %913 = vmatpush1.bf16.msra.mxu0 %v740
    %914 = vmatprep.subr.bf16.mxu0 %v749
    %915 = vmatpush1.bf16.msra.mxu0 %v748
    %916 = vmatprep.mubr.bf16.mxu0 %v115
    %917 = vmatmul.mubr.bf16.gmra.mrb[0].mxu0 %v114
    %v918 = vpop.f32.mrb[0].mxu0
    %v919 = vadd.f32 0.0, %v918
    %v920 = vpop.f32.mrb[0].mxu0
    %v921 = vadd.f32 0.0, %v920
    %v922 = vpop.f32.mrb[0].mxu0
    %v923 = vpop.f32.mrb[0].mxu0
    %924 = vdwg.mxu0
    %925 = vmatprep.subr.bf16.mxu0 %v631
    %926 = vmatpush1.bf16.msra.mxu0 %v630
    %927 = vmatprep.subr.bf16.mxu0 %v639
    %928 = vmatpush1.bf16.msra.mxu0 %v638
    %929 = vmatprep.subr.bf16.mxu0 %v647
    %930 = vmatpush1.bf16.msra.mxu0 %v646
    %931 = vmatprep.subr.bf16.mxu0 %v655
    %932 = vmatpush1.bf16.msra.mxu0 %v654
    %933 = vmatprep.subr.bf16.mxu0 %v663
    %934 = vmatpush1.bf16.msra.mxu0 %v662
    %935 = vmatprep.subr.bf16.mxu0 %v671
    %936 = vmatpush1.bf16.msra.mxu0 %v670
    %937 = vmatprep.subr.bf16.mxu0 %v679
    %938 = vmatpush1.bf16.msra.mxu0 %v678
    %939 = vmatprep.subr.bf16.mxu0 %v687
    %940 = vmatpush1.bf16.msra.mxu0 %v686
    %941 = vmatprep.subr.bf16.mxu0 %v695
    %942 = vmatpush1.bf16.msra.mxu0 %v694
    %943 = vmatprep.subr.bf16.mxu0 %v703
    %944 = vmatpush1.bf16.msra.mxu0 %v702
    %945 = vmatprep.subr.bf16.mxu0 %v711
    %946 = vmatpush1.bf16.msra.mxu0 %v710
    %947 = vmatprep.subr.bf16.mxu0 %v719
    %948 = vmatpush1.bf16.msra.mxu0 %v718
    %949 = vmatprep.subr.bf16.mxu0 %v727
    %950 = vmatpush1.bf16.msra.mxu0 %v726
    %951 = vmatprep.subr.bf16.mxu0 %v735
    %952 = vmatpush1.bf16.msra.mxu0 %v734
    %953 = vmatprep.subr.bf16.mxu0 %v743
    %954 = vmatpush1.bf16.msra.mxu0 %v742
    %955 = vmatprep.subr.bf16.mxu0 %v751
    %956 = vmatpush1.bf16.msra.mxu0 %v750
    %957 = vmatprep.mubr.bf16.mxu0 %v115
    %958 = vmatmul.mubr.bf16.gmra.mrb[0].mxu0 %v114
    %v959 = vpop.f32.mrb[0].mxu0
    %v960 = vadd.f32 0.0, %v959
    %v961 = vpop.f32.mrb[0].mxu0
    %v962 = vadd.f32 0.0, %v961
    %v963 = vpop.f32.mrb[0].mxu0
    %v964 = vpop.f32.mrb[0].mxu0
    %965 = vdwg.mxu0
    %966 = vmatprep.subr.bf16.mxu0 %v633
    %967 = vmatpush1.bf16.msra.mxu0 %v632
    %968 = vmatprep.subr.bf16.mxu0 %v641
    %969 = vmatpush1.bf16.msra.mxu0 %v640
    %970 = vmatprep.subr.bf16.mxu0 %v649
    %971 = vmatpush1.bf16.msra.mxu0 %v648
    %972 = vmatprep.subr.bf16.mxu0 %v657
    %973 = vmatpush1.bf16.msra.mxu0 %v656
    %974 = vmatprep.subr.bf16.mxu0 %v665
    %975 = vmatpush1.bf16.msra.mxu0 %v664
    %976 = vmatprep.subr.bf16.mxu0 %v673
    %977 = vmatpush1.bf16.msra.mxu0 %v672
    %978 = vmatprep.subr.bf16.mxu0 %v681
    %979 = vmatpush1.bf16.msra.mxu0 %v680
    %980 = vmatprep.subr.bf16.mxu0 %v689
    %981 = vmatpush1.bf16.msra.mxu0 %v688
    %982 = vmatprep.subr.bf16.mxu0 %v697
    %983 = vmatpush1.bf16.msra.mxu0 %v696
    %984 = vmatprep.subr.bf16.mxu0 %v705
    %985 = vmatpush1.bf16.msra.mxu0 %v704
    %986 = vmatprep.subr.bf16.mxu0 %v713
    %987 = vmatpush1.bf16.msra.mxu0 %v712
    %988 = vmatprep.subr.bf16.mxu0 %v721
    %989 = vmatpush1.bf16.msra.mxu0 %v720
    %990 = vmatprep.subr.bf16.mxu0 %v729
    %991 = vmatpush1.bf16.msra.mxu0 %v728
    %992 = vmatprep.subr.bf16.mxu0 %v737
    %993 = vmatpush1.bf16.msra.mxu0 %v736
    %994 = vmatprep.subr.bf16.mxu0 %v745
    %995 = vmatpush1.bf16.msra.mxu0 %v744
    %996 = vmatprep.subr.bf16.mxu0 %v753
    %997 = vmatpush1.bf16.msra.mxu0 %v752
    %998 = vmatprep.mubr.bf16.mxu0 %v115
    %999 = vmatmul.mubr.bf16.gmra.mrb[0].mxu0 %v114
    %v1000 = vpop.f32.mrb[0].mxu0
    %v1001 = vadd.f32 0.0, %v1000
    %v1002 = vpop.f32.mrb[0].mxu0
    %v1003 = vadd.f32 0.0, %v1002
    %v1004 = vpop.f32.mrb[0].mxu0
    %v1005 = vpop.f32.mrb[0].mxu0
    %1006 = vdwg.mxu0
    %1007 = vmatprep.subr.bf16.mxu0 %v635
    %1008 = vmatpush1.bf16.msra.mxu0 %v634
    %1009 = vmatprep.subr.bf16.mxu0 %v643
    %1010 = vmatpush1.bf16.msra.mxu0 %v642
    %1011 = vmatprep.subr.bf16.mxu0 %v651
    %1012 = vmatpush1.bf16.msra.mxu0 %v650
    %1013 = vmatprep.subr.bf16.mxu0 %v659
    %1014 = vmatpush1.bf16.msra.mxu0 %v658
    %1015 = vmatprep.subr.bf16.mxu0 %v667
    %1016 = vmatpush1.bf16.msra.mxu0 %v666
    %1017 = vmatprep.subr.bf16.mxu0 %v675
    %1018 = vmatpush1.bf16.msra.mxu0 %v674
    %1019 = vmatprep.subr.bf16.mxu0 %v683
    %1020 = vmatpush1.bf16.msra.mxu0 %v682
    %1021 = vmatprep.subr.bf16.mxu0 %v691
    %1022 = vmatpush1.bf16.msra.mxu0 %v690
    %1023 = vmatprep.subr.bf16.mxu0 %v699
    %1024 = vmatpush1.bf16.msra.mxu0 %v698
    %1025 = vmatprep.subr.bf16.mxu0 %v707
    %1026 = vmatpush1.bf16.msra.mxu0 %v706
    %1027 = vmatprep.subr.bf16.mxu0 %v715
    %1028 = vmatpush1.bf16.msra.mxu0 %v714
    %1029 = vmatprep.subr.bf16.mxu0 %v723
    %1030 = vmatpush1.bf16.msra.mxu0 %v722
    %1031 = vmatprep.subr.bf16.mxu0 %v731
    %1032 = vmatpush1.bf16.msra.mxu0 %v730
    %1033 = vmatprep.subr.bf16.mxu0 %v739
    %1034 = vmatpush1.bf16.msra.mxu0 %v738
    %1035 = vmatprep.subr.bf16.mxu0 %v747
    %1036 = vmatpush1.bf16.msra.mxu0 %v746
    %1037 = vmatprep.subr.bf16.mxu0 %v755
    %1038 = vmatpush1.bf16.msra.mxu0 %v754
    %1039 = vmatprep.mubr.bf16.mxu0 %v115
    %1040 = vmatmul.mubr.bf16.gmra.mrb[0].mxu0 %v114
    %v1041 = vpop.f32.mrb[0].mxu0
    %v1042 = vadd.f32 0.0, %v1041
    %v1043 = vpop.f32.mrb[0].mxu0
    %v1044 = vadd.f32 0.0, %v1043
    %v1045 = vpop.f32.mrb[0].mxu0
    %v1046 = vpop.f32.mrb[0].mxu0
    %1047 = vdwg.mxu0
    %v1048 = vadd.f32 %v104, %v919
    %v1049 = vadd.f32 %v105, %v921
    %v1050 = vadd.f32 %v106, %v960
    %v1051 = vadd.f32 %v107, %v962
    %v1052 = vadd.f32 %v108, %v1001
    %v1053 = vadd.f32 %v109, %v1003
    %v1054 = vadd.f32 %v110, %v1042
    %v1055 = vadd.f32 %v111, %v1044
    %1056 = vst [vmem:[#allocation2] sm:$0xff] %v1048
    %1057 = vst [vmem:[#allocation2 + $0x8] sm:$0xff] %v1049
    %1058 = vst [vmem:[#allocation2 + $0x10] sm:$0xff] %v1050
    %1059 = vst [vmem:[#allocation2 + $0x18] sm:$0xff] %v1051
    %1060 = vst [vmem:[#allocation2 + $0x20] sm:$0xff] %v1052
    %1061 = vst [vmem:[#allocation2 + $0x28] sm:$0xff] %v1053
    %1062 = vst [vmem:[#allocation2 + $0x30] sm:$0xff] %v1054
    %1063 = vst [vmem:[#allocation2 + $0x38] sm:$0xff] %v1055
    // Predicated region
    $region54: #{_forward_jit.1} parent=1 // pred_check
      %p1064 = pneg %p92
    $region55: #{_forward_jit.1} parent=1 // pred_check_branch
      %1066 = sbr.rel (%p1064) target = $region57
    $region56: #{_forward_jit.1} parent=1 // pred_region
      %v1067 = vld [vmem:[#allocation2] sm:$0xff]
      %v1068 = vld [vmem:[#allocation2 + $0x8] sm:$0xff]
      %v1069 = vld [vmem:[#allocation2 + $0x10] sm:$0xff]
      %v1070 = vld [vmem:[#allocation2 + $0x18] sm:$0xff]
      %v1071 = vld [vmem:[#allocation2 + $0x20] sm:$0xff]
      %v1072 = vld [vmem:[#allocation2 + $0x28] sm:$0xff]
      %v1073 = vld [vmem:[#allocation2 + $0x30] sm:$0xff]
      %v1074 = vld [vmem:[#allocation2 + $0x38] sm:$0xff]
      %v1075 = vld [vmem:[#allocation8] sm:$0xff]
      %v1077 = vlaneseq
      %v1078 = vshrl.u32 %v1077, 7
      %v1079 = vsub.s32 0, %v1078
      %v1080 = vrot.slane %v1075, %v1079
      %v1081 = vlaneseq
      %v1082 = vshrl.u32 %v1081, 7
      %v1083 = vsub.s32 1, %v1082
      %v1084 = vrot.slane %v1075, %v1083
      %v1085 = vlaneseq
      %v1086 = vshrl.u32 %v1085, 7
      %v1087 = vsub.s32 2, %v1086
      %v1088 = vrot.slane %v1075, %v1087
      %v1089 = vlaneseq
      %v1090 = vshrl.u32 %v1089, 7
      %v1091 = vsub.s32 3, %v1090
      %v1092 = vrot.slane %v1075, %v1091
      %v1093 = vlaneseq
      %v1094 = vshrl.u32 %v1093, 7
      %v1095 = vsub.s32 4, %v1094
      %v1096 = vrot.slane %v1075, %v1095
      %v1097 = vlaneseq
      %v1098 = vshrl.u32 %v1097, 7
      %v1099 = vsub.s32 5, %v1098
      %v1100 = vrot.slane %v1075, %v1099
      %v1101 = vlaneseq
      %v1102 = vshrl.u32 %v1101, 7
      %v1103 = vsub.s32 6, %v1102
      %v1104 = vrot.slane %v1075, %v1103
      %v1105 = vlaneseq
      %v1106 = vshrl.u32 %v1105, 7
      %v1107 = vsub.s32 7, %v1106
      %v1108 = vrot.slane %v1075, %v1107
      %v1117 = vadd.f32 %v1067, %v1080
      %v1118 = vadd.f32 %v1068, %v1084
      %v1119 = vadd.f32 %v1069, %v1088
      %v1120 = vadd.f32 %v1070, %v1092
      %v1121 = vadd.f32 %v1071, %v1096
      %v1122 = vadd.f32 %v1072, %v1100
      %v1123 = vadd.f32 %v1073, %v1104
      %v1124 = vadd.f32 %v1074, %v1108
      %v1125 = vmax.f32 %v1117, 0.0
      %v1126 = vmax.f32 %v1118, 0.0
      %v1127 = vmax.f32 %v1119, 0.0
      %v1128 = vmax.f32 %v1120, 0.0
      %v1129 = vmax.f32 %v1121, 0.0
      %v1130 = vmax.f32 %v1122, 0.0
      %v1131 = vmax.f32 %v1123, 0.0
      %v1132 = vmax.f32 %v1124, 0.0
      %v1133 = vpack.c.bf16 %v1125, %v1125
      %v1134 = vpack.c.bf16 %v1126, %v1126
      %v1135 = vpack.c.bf16 %v1127, %v1127
      %v1136 = vpack.c.bf16 %v1128, %v1128
      %v1137 = vpack.c.bf16 %v1129, %v1129
      %v1138 = vpack.c.bf16 %v1130, %v1130
      %v1139 = vpack.c.bf16 %v1131, %v1131
      %v1140 = vpack.c.bf16 %v1132, %v1132
      %v1141 = vld [vmem:[#allocation9] sm:$0xff]
      %v1142 = vld [vmem:[#allocation9 + $0x8] sm:$0xff]
      %v1143 = vld [vmem:[#allocation9 + $0x10] sm:$0xff]
      %v1144 = vld [vmem:[#allocation9 + $0x18] sm:$0xff]
      %v1145 = vld [vmem:[#allocation9 + $0x20] sm:$0xff]
      %v1146 = vld [vmem:[#allocation9 + $0x28] sm:$0xff]
      %v1147 = vld [vmem:[#allocation9 + $0x30] sm:$0xff]
      %v1148 = vld [vmem:[#allocation9 + $0x38] sm:$0xff]
      %v1149 = vld [vmem:[#allocation9 + $0x40] sm:$0xff]
      %v1150 = vld [vmem:[#allocation9 + $0x48] sm:$0xff]
      %v1151 = vld [vmem:[#allocation9 + $0x50] sm:$0xff]
      %v1152 = vld [vmem:[#allocation9 + $0x58] sm:$0xff]
      %v1153 = vld [vmem:[#allocation9 + $0x60] sm:$0xff]
      %v1154 = vld [vmem:[#allocation9 + $0x68] sm:$0xff]
      %v1155 = vld [vmem:[#allocation9 + $0x70] sm:$0xff]
      %v1156 = vld [vmem:[#allocation9 + $0x78] sm:$0xff]
      %v1157 = vld [vmem:[#allocation9 + $0x80] sm:$0xff]
      %v1158 = vld [vmem:[#allocation9 + $0x88] sm:$0xff]
      %v1159 = vld [vmem:[#allocation9 + $0x90] sm:$0xff]
      %v1160 = vld [vmem:[#allocation9 + $0x98] sm:$0xff]
      %v1161 = vld [vmem:[#allocation9 + $0xa0] sm:$0xff]
      %v1162 = vld [vmem:[#allocation9 + $0xa8] sm:$0xff]
      %v1163 = vld [vmem:[#allocation9 + $0xb0] sm:$0xff]
      %v1164 = vld [vmem:[#allocation9 + $0xb8] sm:$0xff]
      %v1165 = vld [vmem:[#allocation9 + $0xc0] sm:$0xff]
      %v1166 = vld [vmem:[#allocation9 + $0xc8] sm:$0xff]
      %v1167 = vld [vmem:[#allocation9 + $0xd0] sm:$0xff]
      %v1168 = vld [vmem:[#allocation9 + $0xd8] sm:$0xff]
      %v1169 = vld [vmem:[#allocation9 + $0xe0] sm:$0xff]
      %v1170 = vld [vmem:[#allocation9 + $0xe8] sm:$0xff]
      %v1171 = vld [vmem:[#allocation9 + $0xf0] sm:$0xff]
      %v1172 = vld [vmem:[#allocation9 + $0xf8] sm:$0xff]
      %v1173 = vld [vmem:[#allocation9 + $0x100] sm:$0xff]
      %v1174 = vld [vmem:[#allocation9 + $0x108] sm:$0xff]
      %v1175 = vld [vmem:[#allocation9 + $0x110] sm:$0xff]
      %v1176 = vld [vmem:[#allocation9 + $0x118] sm:$0xff]
      %v1177 = vld [vmem:[#allocation9 + $0x120] sm:$0xff]
      %v1178 = vld [vmem:[#allocation9 + $0x128] sm:$0xff]
      %v1179 = vld [vmem:[#allocation9 + $0x130] sm:$0xff]
      %v1180 = vld [vmem:[#allocation9 + $0x138] sm:$0xff]
      %v1181 = vld [vmem:[#allocation9 + $0x140] sm:$0xff]
      %v1182 = vld [vmem:[#allocation9 + $0x148] sm:$0xff]
      %v1183 = vld [vmem:[#allocation9 + $0x150] sm:$0xff]
      %v1184 = vld [vmem:[#allocation9 + $0x158] sm:$0xff]
      %v1185 = vld [vmem:[#allocation9 + $0x160] sm:$0xff]
      %v1186 = vld [vmem:[#allocation9 + $0x168] sm:$0xff]
      %v1187 = vld [vmem:[#allocation9 + $0x170] sm:$0xff]
      %v1188 = vld [vmem:[#allocation9 + $0x178] sm:$0xff]
      %v1189 = vld [vmem:[#allocation9 + $0x180] sm:$0xff]
      %v1190 = vld [vmem:[#allocation9 + $0x188] sm:$0xff]
      %v1191 = vld [vmem:[#allocation9 + $0x190] sm:$0xff]
      %v1192 = vld [vmem:[#allocation9 + $0x198] sm:$0xff]
      %v1193 = vld [vmem:[#allocation9 + $0x1a0] sm:$0xff]
      %v1194 = vld [vmem:[#allocation9 + $0x1a8] sm:$0xff]
      %v1195 = vld [vmem:[#allocation9 + $0x1b0] sm:$0xff]
      %v1196 = vld [vmem:[#allocation9 + $0x1b8] sm:$0xff]
      %v1197 = vld [vmem:[#allocation9 + $0x1c0] sm:$0xff]
      %v1198 = vld [vmem:[#allocation9 + $0x1c8] sm:$0xff]
      %v1199 = vld [vmem:[#allocation9 + $0x1d0] sm:$0xff]
      %v1200 = vld [vmem:[#allocation9 + $0x1d8] sm:$0xff]
      %v1201 = vld [vmem:[#allocation9 + $0x1e0] sm:$0xff]
      %v1202 = vld [vmem:[#allocation9 + $0x1e8] sm:$0xff]
      %v1203 = vld [vmem:[#allocation9 + $0x1f0] sm:$0xff]
      %v1204 = vld [vmem:[#allocation9 + $0x1f8] sm:$0xff]
      %v1205 = vld [vmem:[#allocation9 + $0x200] sm:$0xff]
      %v1206 = vld [vmem:[#allocation9 + $0x208] sm:$0xff]
      %v1207 = vld [vmem:[#allocation9 + $0x210] sm:$0xff]
      %v1208 = vld [vmem:[#allocation9 + $0x218] sm:$0xff]
      %v1209 = vld [vmem:[#allocation9 + $0x220] sm:$0xff]
      %v1210 = vld [vmem:[#allocation9 + $0x228] sm:$0xff]
      %v1211 = vld [vmem:[#allocation9 + $0x230] sm:$0xff]
      %v1212 = vld [vmem:[#allocation9 + $0x238] sm:$0xff]
      %v1213 = vld [vmem:[#allocation9 + $0x240] sm:$0xff]
      %v1214 = vld [vmem:[#allocation9 + $0x248] sm:$0xff]
      %v1215 = vld [vmem:[#allocation9 + $0x250] sm:$0xff]
      %v1216 = vld [vmem:[#allocation9 + $0x258] sm:$0xff]
      %v1217 = vld [vmem:[#allocation9 + $0x260] sm:$0xff]
      %v1218 = vld [vmem:[#allocation9 + $0x268] sm:$0xff]
      %v1219 = vld [vmem:[#allocation9 + $0x270] sm:$0xff]
      %v1220 = vld [vmem:[#allocation9 + $0x278] sm:$0xff]
      %v1221 = vld [vmem:[#allocation9 + $0x280] sm:$0xff]
      %v1222 = vld [vmem:[#allocation9 + $0x288] sm:$0xff]
      %v1223 = vld [vmem:[#allocation9 + $0x290] sm:$0xff]
      %v1224 = vld [vmem:[#allocation9 + $0x298] sm:$0xff]
      %v1225 = vld [vmem:[#allocation9 + $0x2a0] sm:$0xff]
      %v1226 = vld [vmem:[#allocation9 + $0x2a8] sm:$0xff]
      %v1227 = vld [vmem:[#allocation9 + $0x2b0] sm:$0xff]
      %v1228 = vld [vmem:[#allocation9 + $0x2b8] sm:$0xff]
      %v1229 = vld [vmem:[#allocation9 + $0x2c0] sm:$0xff]
      %v1230 = vld [vmem:[#allocation9 + $0x2c8] sm:$0xff]
      %v1231 = vld [vmem:[#allocation9 + $0x2d0] sm:$0xff]
      %v1232 = vld [vmem:[#allocation9 + $0x2d8] sm:$0xff]
      %v1233 = vld [vmem:[#allocation9 + $0x2e0] sm:$0xff]
      %v1234 = vld [vmem:[#allocation9 + $0x2e8] sm:$0xff]
      %v1235 = vld [vmem:[#allocation9 + $0x2f0] sm:$0xff]
      %v1236 = vld [vmem:[#allocation9 + $0x2f8] sm:$0xff]
      %v1237 = vld [vmem:[#allocation9 + $0x300] sm:$0xff]
      %v1238 = vld [vmem:[#allocation9 + $0x308] sm:$0xff]
      %v1239 = vld [vmem:[#allocation9 + $0x310] sm:$0xff]
      %v1240 = vld [vmem:[#allocation9 + $0x318] sm:$0xff]
      %v1241 = vld [vmem:[#allocation9 + $0x320] sm:$0xff]
      %v1242 = vld [vmem:[#allocation9 + $0x328] sm:$0xff]
      %v1243 = vld [vmem:[#allocation9 + $0x330] sm:$0xff]
      %v1244 = vld [vmem:[#allocation9 + $0x338] sm:$0xff]
      %v1245 = vld [vmem:[#allocation9 + $0x340] sm:$0xff]
      %v1246 = vld [vmem:[#allocation9 + $0x348] sm:$0xff]
      %v1247 = vld [vmem:[#allocation9 + $0x350] sm:$0xff]
      %v1248 = vld [vmem:[#allocation9 + $0x358] sm:$0xff]
      %v1249 = vld [vmem:[#allocation9 + $0x360] sm:$0xff]
      %v1250 = vld [vmem:[#allocation9 + $0x368] sm:$0xff]
      %v1251 = vld [vmem:[#allocation9 + $0x370] sm:$0xff]
      %v1252 = vld [vmem:[#allocation9 + $0x378] sm:$0xff]
      %v1253 = vld [vmem:[#allocation9 + $0x380] sm:$0xff]
      %v1254 = vld [vmem:[#allocation9 + $0x388] sm:$0xff]
      %v1255 = vld [vmem:[#allocation9 + $0x390] sm:$0xff]
      %v1256 = vld [vmem:[#allocation9 + $0x398] sm:$0xff]
      %v1257 = vld [vmem:[#allocation9 + $0x3a0] sm:$0xff]
      %v1258 = vld [vmem:[#allocation9 + $0x3a8] sm:$0xff]
      %v1259 = vld [vmem:[#allocation9 + $0x3b0] sm:$0xff]
      %v1260 = vld [vmem:[#allocation9 + $0x3b8] sm:$0xff]
      %v1261 = vld [vmem:[#allocation9 + $0x3c0] sm:$0xff]
      %v1262 = vld [vmem:[#allocation9 + $0x3c8] sm:$0xff]
      %v1263 = vld [vmem:[#allocation9 + $0x3d0] sm:$0xff]
      %v1264 = vld [vmem:[#allocation9 + $0x3d8] sm:$0xff]
      %v1265 = vld [vmem:[#allocation9 + $0x3e0] sm:$0xff]
      %v1266 = vld [vmem:[#allocation9 + $0x3e8] sm:$0xff]
      %v1267 = vld [vmem:[#allocation9 + $0x3f0] sm:$0xff]
      %v1268 = vld [vmem:[#allocation9 + $0x3f8] sm:$0xff]
      %v1269 = vld [vmem:[%s4] sm:$0x3]
      %v1271 = vlaneseq
      %v1272 = vshrl.u32 %v1271, 7
      %v1273 = vsub.s32 0, %v1272
      %v1274 = vrot.slane %v1269, %v1273
      %v1275 = vlaneseq
      %v1276 = vshrl.u32 %v1275, 7
      %v1277 = vsub.s32 1, %v1276
      %v1278 = vrot.slane %v1269, %v1277
      %v1409 = vunpack.c.l.b16 %v1141
      %v1410 = vunpack.c.h.b16 %v1141
      %v1411 = vunpack.c.l.b16 %v1142
      %v1412 = vunpack.c.h.b16 %v1142
      %v1413 = vunpack.c.l.b16 %v1143
      %v1414 = vunpack.c.h.b16 %v1143
      %v1415 = vunpack.c.l.b16 %v1144
      %v1416 = vunpack.c.h.b16 %v1144
      %v1417 = vunpack.c.l.b16 %v1145
      %v1418 = vunpack.c.h.b16 %v1145
      %v1419 = vunpack.c.l.b16 %v1146
      %v1420 = vunpack.c.h.b16 %v1146
      %v1421 = vunpack.c.l.b16 %v1147
      %v1422 = vunpack.c.h.b16 %v1147
      %v1423 = vunpack.c.l.b16 %v1148
      %v1424 = vunpack.c.h.b16 %v1148
      %v1425 = vunpack.c.l.b16 %v1149
      %v1426 = vunpack.c.h.b16 %v1149
      %v1427 = vunpack.c.l.b16 %v1150
      %v1428 = vunpack.c.h.b16 %v1150
      %v1429 = vunpack.c.l.b16 %v1151
      %v1430 = vunpack.c.h.b16 %v1151
      %v1431 = vunpack.c.l.b16 %v1152
      %v1432 = vunpack.c.h.b16 %v1152
      %v1433 = vunpack.c.l.b16 %v1153
      %v1434 = vunpack.c.h.b16 %v1153
      %v1435 = vunpack.c.l.b16 %v1154
      %v1436 = vunpack.c.h.b16 %v1154
      %v1437 = vunpack.c.l.b16 %v1155
      %v1438 = vunpack.c.h.b16 %v1155
      %v1439 = vunpack.c.l.b16 %v1156
      %v1440 = vunpack.c.h.b16 %v1156
      %v1441 = vunpack.c.l.b16 %v1157
      %v1442 = vunpack.c.h.b16 %v1157
      %v1443 = vunpack.c.l.b16 %v1158
      %v1444 = vunpack.c.h.b16 %v1158
      %v1445 = vunpack.c.l.b16 %v1159
      %v1446 = vunpack.c.h.b16 %v1159
      %v1447 = vunpack.c.l.b16 %v1160
      %v1448 = vunpack.c.h.b16 %v1160
      %v1449 = vunpack.c.l.b16 %v1161
      %v1450 = vunpack.c.h.b16 %v1161
      %v1451 = vunpack.c.l.b16 %v1162
      %v1452 = vunpack.c.h.b16 %v1162
      %v1453 = vunpack.c.l.b16 %v1163
      %v1454 = vunpack.c.h.b16 %v1163
      %v1455 = vunpack.c.l.b16 %v1164
      %v1456 = vunpack.c.h.b16 %v1164
      %v1457 = vunpack.c.l.b16 %v1165
      %v1458 = vunpack.c.h.b16 %v1165
      %v1459 = vunpack.c.l.b16 %v1166
      %v1460 = vunpack.c.h.b16 %v1166
      %v1461 = vunpack.c.l.b16 %v1167
      %v1462 = vunpack.c.h.b16 %v1167
      %v1463 = vunpack.c.l.b16 %v1168
      %v1464 = vunpack.c.h.b16 %v1168
      %v1465 = vunpack.c.l.b16 %v1169
      %v1466 = vunpack.c.h.b16 %v1169
      %v1467 = vunpack.c.l.b16 %v1170
      %v1468 = vunpack.c.h.b16 %v1170
      %v1469 = vunpack.c.l.b16 %v1171
      %v1470 = vunpack.c.h.b16 %v1171
      %v1471 = vunpack.c.l.b16 %v1172
      %v1472 = vunpack.c.h.b16 %v1172
      %v1473 = vunpack.c.l.b16 %v1173
      %v1474 = vunpack.c.h.b16 %v1173
      %v1475 = vunpack.c.l.b16 %v1174
      %v1476 = vunpack.c.h.b16 %v1174
      %v1477 = vunpack.c.l.b16 %v1175
      %v1478 = vunpack.c.h.b16 %v1175
      %v1479 = vunpack.c.l.b16 %v1176
      %v1480 = vunpack.c.h.b16 %v1176
      %v1481 = vunpack.c.l.b16 %v1177
      %v1482 = vunpack.c.h.b16 %v1177
      %v1483 = vunpack.c.l.b16 %v1178
      %v1484 = vunpack.c.h.b16 %v1178
      %v1485 = vunpack.c.l.b16 %v1179
      %v1486 = vunpack.c.h.b16 %v1179
      %v1487 = vunpack.c.l.b16 %v1180
      %v1488 = vunpack.c.h.b16 %v1180
      %v1489 = vunpack.c.l.b16 %v1181
      %v1490 = vunpack.c.h.b16 %v1181
      %v1491 = vunpack.c.l.b16 %v1182
      %v1492 = vunpack.c.h.b16 %v1182
      %v1493 = vunpack.c.l.b16 %v1183
      %v1494 = vunpack.c.h.b16 %v1183
      %v1495 = vunpack.c.l.b16 %v1184
      %v1496 = vunpack.c.h.b16 %v1184
      %v1497 = vunpack.c.l.b16 %v1185
      %v1498 = vunpack.c.h.b16 %v1185
      %v1499 = vunpack.c.l.b16 %v1186
      %v1500 = vunpack.c.h.b16 %v1186
      %v1501 = vunpack.c.l.b16 %v1187
      %v1502 = vunpack.c.h.b16 %v1187
      %v1503 = vunpack.c.l.b16 %v1188
      %v1504 = vunpack.c.h.b16 %v1188
      %v1505 = vunpack.c.l.b16 %v1189
      %v1506 = vunpack.c.h.b16 %v1189
      %v1507 = vunpack.c.l.b16 %v1190
      %v1508 = vunpack.c.h.b16 %v1190
      %v1509 = vunpack.c.l.b16 %v1191
      %v1510 = vunpack.c.h.b16 %v1191
      %v1511 = vunpack.c.l.b16 %v1192
      %v1512 = vunpack.c.h.b16 %v1192
      %v1513 = vunpack.c.l.b16 %v1193
      %v1514 = vunpack.c.h.b16 %v1193
      %v1515 = vunpack.c.l.b16 %v1194
      %v1516 = vunpack.c.h.b16 %v1194
      %v1517 = vunpack.c.l.b16 %v1195
      %v1518 = vunpack.c.h.b16 %v1195
      %v1519 = vunpack.c.l.b16 %v1196
      %v1520 = vunpack.c.h.b16 %v1196
      %v1521 = vunpack.c.l.b16 %v1197
      %v1522 = vunpack.c.h.b16 %v1197
      %v1523 = vunpack.c.l.b16 %v1198
      %v1524 = vunpack.c.h.b16 %v1198
      %v1525 = vunpack.c.l.b16 %v1199
      %v1526 = vunpack.c.h.b16 %v1199
      %v1527 = vunpack.c.l.b16 %v1200
      %v1528 = vunpack.c.h.b16 %v1200
      %v1529 = vunpack.c.l.b16 %v1201
      %v1530 = vunpack.c.h.b16 %v1201
      %v1531 = vunpack.c.l.b16 %v1202
      %v1532 = vunpack.c.h.b16 %v1202
      %v1533 = vunpack.c.l.b16 %v1203
      %v1534 = vunpack.c.h.b16 %v1203
      %v1535 = vunpack.c.l.b16 %v1204
      %v1536 = vunpack.c.h.b16 %v1204
      %v1537 = vunpack.c.l.b16 %v1205
      %v1538 = vunpack.c.h.b16 %v1205
      %v1539 = vunpack.c.l.b16 %v1206
      %v1540 = vunpack.c.h.b16 %v1206
      %v1541 = vunpack.c.l.b16 %v1207
      %v1542 = vunpack.c.h.b16 %v1207
      %v1543 = vunpack.c.l.b16 %v1208
      %v1544 = vunpack.c.h.b16 %v1208
      %v1545 = vunpack.c.l.b16 %v1209
      %v1546 = vunpack.c.h.b16 %v1209
      %v1547 = vunpack.c.l.b16 %v1210
      %v1548 = vunpack.c.h.b16 %v1210
      %v1549 = vunpack.c.l.b16 %v1211
      %v1550 = vunpack.c.h.b16 %v1211
      %v1551 = vunpack.c.l.b16 %v1212
      %v1552 = vunpack.c.h.b16 %v1212
      %v1553 = vunpack.c.l.b16 %v1213
      %v1554 = vunpack.c.h.b16 %v1213
      %v1555 = vunpack.c.l.b16 %v1214
      %v1556 = vunpack.c.h.b16 %v1214
      %v1557 = vunpack.c.l.b16 %v1215
      %v1558 = vunpack.c.h.b16 %v1215
      %v1559 = vunpack.c.l.b16 %v1216
      %v1560 = vunpack.c.h.b16 %v1216
      %v1561 = vunpack.c.l.b16 %v1217
      %v1562 = vunpack.c.h.b16 %v1217
      %v1563 = vunpack.c.l.b16 %v1218
      %v1564 = vunpack.c.h.b16 %v1218
      %v1565 = vunpack.c.l.b16 %v1219
      %v1566 = vunpack.c.h.b16 %v1219
      %v1567 = vunpack.c.l.b16 %v1220
      %v1568 = vunpack.c.h.b16 %v1220
      %v1569 = vunpack.c.l.b16 %v1221
      %v1570 = vunpack.c.h.b16 %v1221
      %v1571 = vunpack.c.l.b16 %v1222
      %v1572 = vunpack.c.h.b16 %v1222
      %v1573 = vunpack.c.l.b16 %v1223
      %v1574 = vunpack.c.h.b16 %v1223
      %v1575 = vunpack.c.l.b16 %v1224
      %v1576 = vunpack.c.h.b16 %v1224
      %v1577 = vunpack.c.l.b16 %v1225
      %v1578 = vunpack.c.h.b16 %v1225
      %v1579 = vunpack.c.l.b16 %v1226
      %v1580 = vunpack.c.h.b16 %v1226
      %v1581 = vunpack.c.l.b16 %v1227
      %v1582 = vunpack.c.h.b16 %v1227
      %v1583 = vunpack.c.l.b16 %v1228
      %v1584 = vunpack.c.h.b16 %v1228
      %v1585 = vunpack.c.l.b16 %v1229
      %v1586 = vunpack.c.h.b16 %v1229
      %v1587 = vunpack.c.l.b16 %v1230
      %v1588 = vunpack.c.h.b16 %v1230
      %v1589 = vunpack.c.l.b16 %v1231
      %v1590 = vunpack.c.h.b16 %v1231
      %v1591 = vunpack.c.l.b16 %v1232
      %v1592 = vunpack.c.h.b16 %v1232
      %v1593 = vunpack.c.l.b16 %v1233
      %v1594 = vunpack.c.h.b16 %v1233
      %v1595 = vunpack.c.l.b16 %v1234
      %v1596 = vunpack.c.h.b16 %v1234
      %v1597 = vunpack.c.l.b16 %v1235
      %v1598 = vunpack.c.h.b16 %v1235
      %v1599 = vunpack.c.l.b16 %v1236
      %v1600 = vunpack.c.h.b16 %v1236
      %v1601 = vunpack.c.l.b16 %v1237
      %v1602 = vunpack.c.h.b16 %v1237
      %v1603 = vunpack.c.l.b16 %v1238
      %v1604 = vunpack.c.h.b16 %v1238
      %v1605 = vunpack.c.l.b16 %v1239
      %v1606 = vunpack.c.h.b16 %v1239
      %v1607 = vunpack.c.l.b16 %v1240
      %v1608 = vunpack.c.h.b16 %v1240
      %v1609 = vunpack.c.l.b16 %v1241
      %v1610 = vunpack.c.h.b16 %v1241
      %v1611 = vunpack.c.l.b16 %v1242
      %v1612 = vunpack.c.h.b16 %v1242
      %v1613 = vunpack.c.l.b16 %v1243
      %v1614 = vunpack.c.h.b16 %v1243
      %v1615 = vunpack.c.l.b16 %v1244
      %v1616 = vunpack.c.h.b16 %v1244
      %v1617 = vunpack.c.l.b16 %v1245
      %v1618 = vunpack.c.h.b16 %v1245
      %v1619 = vunpack.c.l.b16 %v1246
      %v1620 = vunpack.c.h.b16 %v1246
      %v1621 = vunpack.c.l.b16 %v1247
      %v1622 = vunpack.c.h.b16 %v1247
      %v1623 = vunpack.c.l.b16 %v1248
      %v1624 = vunpack.c.h.b16 %v1248
      %v1625 = vunpack.c.l.b16 %v1249
      %v1626 = vunpack.c.h.b16 %v1249
      %v1627 = vunpack.c.l.b16 %v1250
      %v1628 = vunpack.c.h.b16 %v1250
      %v1629 = vunpack.c.l.b16 %v1251
      %v1630 = vunpack.c.h.b16 %v1251
      %v1631 = vunpack.c.l.b16 %v1252
      %v1632 = vunpack.c.h.b16 %v1252
      %v1633 = vunpack.c.l.b16 %v1253
      %v1634 = vunpack.c.h.b16 %v1253
      %v1635 = vunpack.c.l.b16 %v1254
      %v1636 = vunpack.c.h.b16 %v1254
      %v1637 = vunpack.c.l.b16 %v1255
      %v1638 = vunpack.c.h.b16 %v1255
      %v1639 = vunpack.c.l.b16 %v1256
      %v1640 = vunpack.c.h.b16 %v1256
      %v1641 = vunpack.c.l.b16 %v1257
      %v1642 = vunpack.c.h.b16 %v1257
      %v1643 = vunpack.c.l.b16 %v1258
      %v1644 = vunpack.c.h.b16 %v1258
      %v1645 = vunpack.c.l.b16 %v1259
      %v1646 = vunpack.c.h.b16 %v1259
      %v1647 = vunpack.c.l.b16 %v1260
      %v1648 = vunpack.c.h.b16 %v1260
      %v1649 = vunpack.c.l.b16 %v1261
      %v1650 = vunpack.c.h.b16 %v1261
      %v1651 = vunpack.c.l.b16 %v1262
      %v1652 = vunpack.c.h.b16 %v1262
      %v1653 = vunpack.c.l.b16 %v1263
      %v1654 = vunpack.c.h.b16 %v1263
      %v1655 = vunpack.c.l.b16 %v1264
      %v1656 = vunpack.c.h.b16 %v1264
      %v1657 = vunpack.c.l.b16 %v1265
      %v1658 = vunpack.c.h.b16 %v1265
      %v1659 = vunpack.c.l.b16 %v1266
      %v1660 = vunpack.c.h.b16 %v1266
      %v1661 = vunpack.c.l.b16 %v1267
      %v1662 = vunpack.c.h.b16 %v1267
      %v1663 = vunpack.c.l.b16 %v1268
      %v1664 = vunpack.c.h.b16 %v1268
      %v1665 = vpack.c.b16 %v1411, %v1409
      %v1666 = vpack.c.b16 %v1412, %v1410
      %v1667 = vpack.c.b16 %v1415, %v1413
      %v1668 = vpack.c.b16 %v1416, %v1414
      %v1669 = vpack.c.b16 %v1419, %v1417
      %v1670 = vpack.c.b16 %v1420, %v1418
      %v1671 = vpack.c.b16 %v1423, %v1421
      %v1672 = vpack.c.b16 %v1424, %v1422
      %v1673 = vpack.c.b16 %v1427, %v1425
      %v1674 = vpack.c.b16 %v1428, %v1426
      %v1675 = vpack.c.b16 %v1431, %v1429
      %v1676 = vpack.c.b16 %v1432, %v1430
      %v1677 = vpack.c.b16 %v1435, %v1433
      %v1678 = vpack.c.b16 %v1436, %v1434
      %v1679 = vpack.c.b16 %v1439, %v1437
      %v1680 = vpack.c.b16 %v1440, %v1438
      %v1681 = vpack.c.b16 %v1443, %v1441
      %v1682 = vpack.c.b16 %v1444, %v1442
      %v1683 = vpack.c.b16 %v1447, %v1445
      %v1684 = vpack.c.b16 %v1448, %v1446
      %v1685 = vpack.c.b16 %v1451, %v1449
      %v1686 = vpack.c.b16 %v1452, %v1450
      %v1687 = vpack.c.b16 %v1455, %v1453
      %v1688 = vpack.c.b16 %v1456, %v1454
      %v1689 = vpack.c.b16 %v1459, %v1457
      %v1690 = vpack.c.b16 %v1460, %v1458
      %v1691 = vpack.c.b16 %v1463, %v1461
      %v1692 = vpack.c.b16 %v1464, %v1462
      %v1693 = vpack.c.b16 %v1467, %v1465
      %v1694 = vpack.c.b16 %v1468, %v1466
      %v1695 = vpack.c.b16 %v1471, %v1469
      %v1696 = vpack.c.b16 %v1472, %v1470
      %v1697 = vpack.c.b16 %v1475, %v1473
      %v1698 = vpack.c.b16 %v1476, %v1474
      %v1699 = vpack.c.b16 %v1479, %v1477
      %v1700 = vpack.c.b16 %v1480, %v1478
      %v1701 = vpack.c.b16 %v1483, %v1481
      %v1702 = vpack.c.b16 %v1484, %v1482
      %v1703 = vpack.c.b16 %v1487, %v1485
      %v1704 = vpack.c.b16 %v1488, %v1486
      %v1705 = vpack.c.b16 %v1491, %v1489
      %v1706 = vpack.c.b16 %v1492, %v1490
      %v1707 = vpack.c.b16 %v1495, %v1493
      %v1708 = vpack.c.b16 %v1496, %v1494
      %v1709 = vpack.c.b16 %v1499, %v1497
      %v1710 = vpack.c.b16 %v1500, %v1498
      %v1711 = vpack.c.b16 %v1503, %v1501
      %v1712 = vpack.c.b16 %v1504, %v1502
      %v1713 = vpack.c.b16 %v1507, %v1505
      %v1714 = vpack.c.b16 %v1508, %v1506
      %v1715 = vpack.c.b16 %v1511, %v1509
      %v1716 = vpack.c.b16 %v1512, %v1510
      %v1717 = vpack.c.b16 %v1515, %v1513
      %v1718 = vpack.c.b16 %v1516, %v1514
      %v1719 = vpack.c.b16 %v1519, %v1517
      %v1720 = vpack.c.b16 %v1520, %v1518
      %v1721 = vpack.c.b16 %v1523, %v1521
      %v1722 = vpack.c.b16 %v1524, %v1522
      %v1723 = vpack.c.b16 %v1527, %v1525
      %v1724 = vpack.c.b16 %v1528, %v1526
      %v1725 = vpack.c.b16 %v1531, %v1529
      %v1726 = vpack.c.b16 %v1532, %v1530
      %v1727 = vpack.c.b16 %v1535, %v1533
      %v1728 = vpack.c.b16 %v1536, %v1534
      %v1729 = vpack.c.b16 %v1539, %v1537
      %v1730 = vpack.c.b16 %v1540, %v1538
      %v1731 = vpack.c.b16 %v1543, %v1541
      %v1732 = vpack.c.b16 %v1544, %v1542
      %v1733 = vpack.c.b16 %v1547, %v1545
      %v1734 = vpack.c.b16 %v1548, %v1546
      %v1735 = vpack.c.b16 %v1551, %v1549
      %v1736 = vpack.c.b16 %v1552, %v1550
      %v1737 = vpack.c.b16 %v1555, %v1553
      %v1738 = vpack.c.b16 %v1556, %v1554
      %v1739 = vpack.c.b16 %v1559, %v1557
      %v1740 = vpack.c.b16 %v1560, %v1558
      %v1741 = vpack.c.b16 %v1563, %v1561
      %v1742 = vpack.c.b16 %v1564, %v1562
      %v1743 = vpack.c.b16 %v1567, %v1565
      %v1744 = vpack.c.b16 %v1568, %v1566
      %v1745 = vpack.c.b16 %v1571, %v1569
      %v1746 = vpack.c.b16 %v1572, %v1570
      %v1747 = vpack.c.b16 %v1575, %v1573
      %v1748 = vpack.c.b16 %v1576, %v1574
      %v1749 = vpack.c.b16 %v1579, %v1577
      %v1750 = vpack.c.b16 %v1580, %v1578
      %v1751 = vpack.c.b16 %v1583, %v1581
      %v1752 = vpack.c.b16 %v1584, %v1582
      %v1753 = vpack.c.b16 %v1587, %v1585
      %v1754 = vpack.c.b16 %v1588, %v1586
      %v1755 = vpack.c.b16 %v1591, %v1589
      %v1756 = vpack.c.b16 %v1592, %v1590
      %v1757 = vpack.c.b16 %v1595, %v1593
      %v1758 = vpack.c.b16 %v1596, %v1594
      %v1759 = vpack.c.b16 %v1599, %v1597
      %v1760 = vpack.c.b16 %v1600, %v1598
      %v1761 = vpack.c.b16 %v1603, %v1601
      %v1762 = vpack.c.b16 %v1604, %v1602
      %v1763 = vpack.c.b16 %v1607, %v1605
      %v1764 = vpack.c.b16 %v1608, %v1606
      %v1765 = vpack.c.b16 %v1611, %v1609
      %v1766 = vpack.c.b16 %v1612, %v1610
      %v1767 = vpack.c.b16 %v1615, %v1613
      %v1768 = vpack.c.b16 %v1616, %v1614
      %v1769 = vpack.c.b16 %v1619, %v1617
      %v1770 = vpack.c.b16 %v1620, %v1618
      %v1771 = vpack.c.b16 %v1623, %v1621
      %v1772 = vpack.c.b16 %v1624, %v1622
      %v1773 = vpack.c.b16 %v1627, %v1625
      %v1774 = vpack.c.b16 %v1628, %v1626
      %v1775 = vpack.c.b16 %v1631, %v1629
      %v1776 = vpack.c.b16 %v1632, %v1630
      %v1777 = vpack.c.b16 %v1635, %v1633
      %v1778 = vpack.c.b16 %v1636, %v1634
      %v1779 = vpack.c.b16 %v1639, %v1637
      %v1780 = vpack.c.b16 %v1640, %v1638
      %v1781 = vpack.c.b16 %v1643, %v1641
      %v1782 = vpack.c.b16 %v1644, %v1642
      %v1783 = vpack.c.b16 %v1647, %v1645
      %v1784 = vpack.c.b16 %v1648, %v1646
      %v1785 = vpack.c.b16 %v1651, %v1649
      %v1786 = vpack.c.b16 %v1652, %v1650
      %v1787 = vpack.c.b16 %v1655, %v1653
      %v1788 = vpack.c.b16 %v1656, %v1654
      %v1789 = vpack.c.b16 %v1659, %v1657
      %v1790 = vpack.c.b16 %v1660, %v1658
      %v1791 = vpack.c.b16 %v1663, %v1661
      %v1792 = vpack.c.b16 %v1664, %v1662
      %1921 = vmatprep.subr.bf16.mxu0 %v1666
      %1922 = vmatpush1.bf16.msra.mxu0 %v1665
      %1923 = vmatprep.subr.bf16.mxu0 %v1668
      %1924 = vmatpush1.bf16.msra.mxu0 %v1667
      %1925 = vmatprep.subr.bf16.mxu0 %v1670
      %1926 = vmatpush1.bf16.msra.mxu0 %v1669
      %1927 = vmatprep.subr.bf16.mxu0 %v1672
      %1928 = vmatpush1.bf16.msra.mxu0 %v1671
      %1929 = vmatprep.subr.bf16.mxu0 %v1674
      %1930 = vmatpush1.bf16.msra.mxu0 %v1673
      %1931 = vmatprep.subr.bf16.mxu0 %v1676
      %1932 = vmatpush1.bf16.msra.mxu0 %v1675
      %1933 = vmatprep.subr.bf16.mxu0 %v1678
      %1934 = vmatpush1.bf16.msra.mxu0 %v1677
      %1935 = vmatprep.subr.bf16.mxu0 %v1680
      %1936 = vmatpush1.bf16.msra.mxu0 %v1679
      %1937 = vmatprep.subr.bf16.mxu0 %v1682
      %1938 = vmatpush1.bf16.msra.mxu0 %v1681
      %1939 = vmatprep.subr.bf16.mxu0 %v1684
      %1940 = vmatpush1.bf16.msra.mxu0 %v1683
      %1941 = vmatprep.subr.bf16.mxu0 %v1686
      %1942 = vmatpush1.bf16.msra.mxu0 %v1685
      %1943 = vmatprep.subr.bf16.mxu0 %v1688
      %1944 = vmatpush1.bf16.msra.mxu0 %v1687
      %1945 = vmatprep.subr.bf16.mxu0 %v1690
      %1946 = vmatpush1.bf16.msra.mxu0 %v1689
      %1947 = vmatprep.subr.bf16.mxu0 %v1692
      %1948 = vmatpush1.bf16.msra.mxu0 %v1691
      %1949 = vmatprep.subr.bf16.mxu0 %v1694
      %1950 = vmatpush1.bf16.msra.mxu0 %v1693
      %1951 = vmatprep.subr.bf16.mxu0 %v1696
      %1952 = vmatpush1.bf16.msra.mxu0 %v1695
      %1953 = vmatprep.mubr.bf16.mxu0 %v1134
      %1954 = vmatmul.mubr.bf16.gmra.mrb[0].mxu0 %v1133
      %v1955 = vpop.f32.mrb[0].mxu0
      %v1956 = vadd.f32 %v1274, %v1955
      %v1957 = vpop.f32.mrb[0].mxu0
      %v1958 = vadd.f32 %v1278, %v1957
      %v1959 = vpop.f32.mrb[0].mxu0
      %v1960 = vpop.f32.mrb[0].mxu0
      %1961 = vdwg.mxu0
      %1962 = vmatprep.subr.bf16.mxu0 %v1698
      %1963 = vmatpush1.bf16.msra.mxu0 %v1697
      %1964 = vmatprep.subr.bf16.mxu0 %v1700
      %1965 = vmatpush1.bf16.msra.mxu0 %v1699
      %1966 = vmatprep.subr.bf16.mxu0 %v1702
      %1967 = vmatpush1.bf16.msra.mxu0 %v1701
      %1968 = vmatprep.subr.bf16.mxu0 %v1704
      %1969 = vmatpush1.bf16.msra.mxu0 %v1703
      %1970 = vmatprep.subr.bf16.mxu0 %v1706
      %1971 = vmatpush1.bf16.msra.mxu0 %v1705
      %1972 = vmatprep.subr.bf16.mxu0 %v1708
      %1973 = vmatpush1.bf16.msra.mxu0 %v1707
      %1974 = vmatprep.subr.bf16.mxu0 %v1710
      %1975 = vmatpush1.bf16.msra.mxu0 %v1709
      %1976 = vmatprep.subr.bf16.mxu0 %v1712
      %1977 = vmatpush1.bf16.msra.mxu0 %v1711
      %1978 = vmatprep.subr.bf16.mxu0 %v1714
      %1979 = vmatpush1.bf16.msra.mxu0 %v1713
      %1980 = vmatprep.subr.bf16.mxu0 %v1716
      %1981 = vmatpush1.bf16.msra.mxu0 %v1715
      %1982 = vmatprep.subr.bf16.mxu0 %v1718
      %1983 = vmatpush1.bf16.msra.mxu0 %v1717
      %1984 = vmatprep.subr.bf16.mxu0 %v1720
      %1985 = vmatpush1.bf16.msra.mxu0 %v1719
      %1986 = vmatprep.subr.bf16.mxu0 %v1722
      %1987 = vmatpush1.bf16.msra.mxu0 %v1721
      %1988 = vmatprep.subr.bf16.mxu0 %v1724
      %1989 = vmatpush1.bf16.msra.mxu0 %v1723
      %1990 = vmatprep.subr.bf16.mxu0 %v1726
      %1991 = vmatpush1.bf16.msra.mxu0 %v1725
      %1992 = vmatprep.subr.bf16.mxu0 %v1728
      %1993 = vmatpush1.bf16.msra.mxu0 %v1727
      %1994 = vmatprep.mubr.bf16.mxu0 %v1136
      %1995 = vmatmul.mubr.bf16.gmra.mrb[0].mxu0 %v1135
      %v1996 = vpop.f32.mrb[0].mxu0
      %v1997 = vadd.f32 %v1956, %v1996
      %v1998 = vpop.f32.mrb[0].mxu0
      %v1999 = vadd.f32 %v1958, %v1998
      %v2000 = vpop.f32.mrb[0].mxu0
      %v2001 = vpop.f32.mrb[0].mxu0
      %2002 = vdwg.mxu0
      %2003 = vmatprep.subr.bf16.mxu0 %v1730
      %2004 = vmatpush1.bf16.msra.mxu0 %v1729
      %2005 = vmatprep.subr.bf16.mxu0 %v1732
      %2006 = vmatpush1.bf16.msra.mxu0 %v1731
      %2007 = vmatprep.subr.bf16.mxu0 %v1734
      %2008 = vmatpush1.bf16.msra.mxu0 %v1733
      %2009 = vmatprep.subr.bf16.mxu0 %v1736
      %2010 = vmatpush1.bf16.msra.mxu0 %v1735
      %2011 = vmatprep.subr.bf16.mxu0 %v1738
      %2012 = vmatpush1.bf16.msra.mxu0 %v1737
      %2013 = vmatprep.subr.bf16.mxu0 %v1740
      %2014 = vmatpush1.bf16.msra.mxu0 %v1739
      %2015 = vmatprep.subr.bf16.mxu0 %v1742
      %2016 = vmatpush1.bf16.msra.mxu0 %v1741
      %2017 = vmatprep.subr.bf16.mxu0 %v1744
      %2018 = vmatpush1.bf16.msra.mxu0 %v1743
      %2019 = vmatprep.subr.bf16.mxu0 %v1746
      %2020 = vmatpush1.bf16.msra.mxu0 %v1745
      %2021 = vmatprep.subr.bf16.mxu0 %v1748
      %2022 = vmatpush1.bf16.msra.mxu0 %v1747
      %2023 = vmatprep.subr.bf16.mxu0 %v1750
      %2024 = vmatpush1.bf16.msra.mxu0 %v1749
      %2025 = vmatprep.subr.bf16.mxu0 %v1752
      %2026 = vmatpush1.bf16.msra.mxu0 %v1751
      %2027 = vmatprep.subr.bf16.mxu0 %v1754
      %2028 = vmatpush1.bf16.msra.mxu0 %v1753
      %2029 = vmatprep.subr.bf16.mxu0 %v1756
      %2030 = vmatpush1.bf16.msra.mxu0 %v1755
      %2031 = vmatprep.subr.bf16.mxu0 %v1758
      %2032 = vmatpush1.bf16.msra.mxu0 %v1757
      %2033 = vmatprep.subr.bf16.mxu0 %v1760
      %2034 = vmatpush1.bf16.msra.mxu0 %v1759
      %2035 = vmatprep.mubr.bf16.mxu0 %v1138
      %2036 = vmatmul.mubr.bf16.gmra.mrb[0].mxu0 %v1137
      %v2037 = vpop.f32.mrb[0].mxu0
      %v2038 = vadd.f32 %v1997, %v2037
      %v2039 = vpop.f32.mrb[0].mxu0
      %v2040 = vadd.f32 %v1999, %v2039
      %v2041 = vpop.f32.mrb[0].mxu0
      %v2042 = vpop.f32.mrb[0].mxu0
      %2043 = vdwg.mxu0
      %2044 = vmatprep.subr.bf16.mxu0 %v1762
      %2045 = vmatpush1.bf16.msra.mxu0 %v1761
      %2046 = vmatprep.subr.bf16.mxu0 %v1764
      %2047 = vmatpush1.bf16.msra.mxu0 %v1763
      %2048 = vmatprep.subr.bf16.mxu0 %v1766
      %2049 = vmatpush1.bf16.msra.mxu0 %v1765
      %2050 = vmatprep.subr.bf16.mxu0 %v1768
      %2051 = vmatpush1.bf16.msra.mxu0 %v1767
      %2052 = vmatprep.subr.bf16.mxu0 %v1770
      %2053 = vmatpush1.bf16.msra.mxu0 %v1769
      %2054 = vmatprep.subr.bf16.mxu0 %v1772
      %2055 = vmatpush1.bf16.msra.mxu0 %v1771
      %2056 = vmatprep.subr.bf16.mxu0 %v1774
      %2057 = vmatpush1.bf16.msra.mxu0 %v1773
      %2058 = vmatprep.subr.bf16.mxu0 %v1776
      %2059 = vmatpush1.bf16.msra.mxu0 %v1775
      %2060 = vmatprep.subr.bf16.mxu0 %v1778
      %2061 = vmatpush1.bf16.msra.mxu0 %v1777
      %2062 = vmatprep.subr.bf16.mxu0 %v1780
      %2063 = vmatpush1.bf16.msra.mxu0 %v1779
      %2064 = vmatprep.subr.bf16.mxu0 %v1782
      %2065 = vmatpush1.bf16.msra.mxu0 %v1781
      %2066 = vmatprep.subr.bf16.mxu0 %v1784
      %2067 = vmatpush1.bf16.msra.mxu0 %v1783
      %2068 = vmatprep.subr.bf16.mxu0 %v1786
      %2069 = vmatpush1.bf16.msra.mxu0 %v1785
      %2070 = vmatprep.subr.bf16.mxu0 %v1788
      %2071 = vmatpush1.bf16.msra.mxu0 %v1787
      %2072 = vmatprep.subr.bf16.mxu0 %v1790
      %2073 = vmatpush1.bf16.msra.mxu0 %v1789
      %2074 = vmatprep.subr.bf16.mxu0 %v1792
      %2075 = vmatpush1.bf16.msra.mxu0 %v1791
      %2076 = vmatprep.mubr.bf16.mxu0 %v1140
      %2077 = vmatmul.mubr.bf16.gmra.mrb[0].mxu0 %v1139
      %v2078 = vpop.f32.mrb[0].mxu0
      %v2079 = vadd.f32 %v2038, %v2078
      %v2080 = vpop.f32.mrb[0].mxu0
      %v2081 = vadd.f32 %v2040, %v2080
      %v2082 = vpop.f32.mrb[0].mxu0
      %v2083 = vpop.f32.mrb[0].mxu0
      %2084 = vdwg.mxu0
      %v2085 = vmax.f32 %v2079, 0.0
      %v2086 = vmax.f32 %v2081, 0.0
      %v2087 = vpack.c.bf16 %v2085, %v2085
      %v2088 = vpack.c.bf16 %v2086, %v2086
      %v2089 = vld [vmem:[#allocation11] sm:$0xf]
      %v2090 = vld [vmem:[#allocation11 + $0x4] sm:$0xf]
      %v2091 = vld [vmem:[#allocation11 + $0x8] sm:$0xf]
      %v2092 = vld [vmem:[#allocation11 + $0xc] sm:$0xf]
      %v2093 = vld [vmem:[#allocation11 + $0x10] sm:$0xf]
      %v2094 = vld [vmem:[#allocation11 + $0x14] sm:$0xf]
      %v2095 = vld [vmem:[#allocation11 + $0x18] sm:$0xf]
      %v2096 = vld [vmem:[#allocation11 + $0x1c] sm:$0xf]
      %v2097 = vld [vmem:[#allocation11 + $0x20] sm:$0xf]
      %v2098 = vld [vmem:[#allocation11 + $0x24] sm:$0xf]
      %v2099 = vld [vmem:[#allocation11 + $0x28] sm:$0xf]
      %v2100 = vld [vmem:[#allocation11 + $0x2c] sm:$0xf]
      %v2101 = vld [vmem:[#allocation11 + $0x30] sm:$0xf]
      %v2102 = vld [vmem:[#allocation11 + $0x34] sm:$0xf]
      %v2103 = vld [vmem:[#allocation11 + $0x38] sm:$0xf]
      %v2104 = vld [vmem:[#allocation11 + $0x3c] sm:$0xf]
      %v2105 = vld [vmem:[#allocation11 + $0x40] sm:$0xf]
      %v2106 = vld [vmem:[#allocation11 + $0x44] sm:$0xf]
      %v2107 = vld [vmem:[#allocation11 + $0x48] sm:$0xf]
      %v2108 = vld [vmem:[#allocation11 + $0x4c] sm:$0xf]
      %v2109 = vld [vmem:[#allocation11 + $0x50] sm:$0xf]
      %v2110 = vld [vmem:[#allocation11 + $0x54] sm:$0xf]
      %v2111 = vld [vmem:[#allocation11 + $0x58] sm:$0xf]
      %v2112 = vld [vmem:[#allocation11 + $0x5c] sm:$0xf]
      %v2113 = vld [vmem:[#allocation11 + $0x60] sm:$0xf]
      %v2114 = vld [vmem:[#allocation11 + $0x64] sm:$0xf]
      %v2115 = vld [vmem:[#allocation11 + $0x68] sm:$0xf]
      %v2116 = vld [vmem:[#allocation11 + $0x6c] sm:$0xf]
      %v2117 = vld [vmem:[#allocation11 + $0x70] sm:$0xf]
      %v2118 = vld [vmem:[#allocation11 + $0x74] sm:$0xf]
      %v2119 = vld [vmem:[#allocation11 + $0x78] sm:$0xf]
      %v2120 = vld [vmem:[#allocation11 + $0x7c] sm:$0xf]
      %v2121 = vld [vmem:[%s6] sm:$0x1]
      %v2123 = vlaneseq
      %v2124 = vshrl.u32 %v2123, 7
      %v2125 = vsub.s32 0, %v2124
      %v2126 = vrot.slane %v2121, %v2125
      %v2160 = vunpack.c.l.b16 %v2089
      %v2161 = vunpack.c.l.b16 %v2090
      %v2162 = vunpack.c.l.b16 %v2091
      %v2163 = vunpack.c.l.b16 %v2092
      %v2164 = vunpack.c.l.b16 %v2093
      %v2165 = vunpack.c.l.b16 %v2094
      %v2166 = vunpack.c.l.b16 %v2095
      %v2167 = vunpack.c.l.b16 %v2096
      %v2168 = vunpack.c.l.b16 %v2097
      %v2169 = vunpack.c.l.b16 %v2098
      %v2170 = vunpack.c.l.b16 %v2099
      %v2171 = vunpack.c.l.b16 %v2100
      %v2172 = vunpack.c.l.b16 %v2101
      %v2173 = vunpack.c.l.b16 %v2102
      %v2174 = vunpack.c.l.b16 %v2103
      %v2175 = vunpack.c.l.b16 %v2104
      %v2176 = vunpack.c.l.b16 %v2105
      %v2177 = vunpack.c.l.b16 %v2106
      %v2178 = vunpack.c.l.b16 %v2107
      %v2179 = vunpack.c.l.b16 %v2108
      %v2180 = vunpack.c.l.b16 %v2109
      %v2181 = vunpack.c.l.b16 %v2110
      %v2182 = vunpack.c.l.b16 %v2111
      %v2183 = vunpack.c.l.b16 %v2112
      %v2184 = vunpack.c.l.b16 %v2113
      %v2185 = vunpack.c.l.b16 %v2114
      %v2186 = vunpack.c.l.b16 %v2115
      %v2187 = vunpack.c.l.b16 %v2116
      %v2188 = vunpack.c.l.b16 %v2117
      %v2189 = vunpack.c.l.b16 %v2118
      %v2190 = vunpack.c.l.b16 %v2119
      %v2191 = vunpack.c.l.b16 %v2120
      %v2192 = vpack.c.b16 %v2161, %v2160
      %v2193 = vpack.c.b16 %v2163, %v2162
      %v2194 = vpack.c.b16 %v2165, %v2164
      %v2195 = vpack.c.b16 %v2167, %v2166
      %v2196 = vpack.c.b16 %v2169, %v2168
      %v2197 = vpack.c.b16 %v2171, %v2170
      %v2198 = vpack.c.b16 %v2173, %v2172
      %v2199 = vpack.c.b16 %v2175, %v2174
      %v2200 = vpack.c.b16 %v2177, %v2176
      %v2201 = vpack.c.b16 %v2179, %v2178
      %v2202 = vpack.c.b16 %v2181, %v2180
      %v2203 = vpack.c.b16 %v2183, %v2182
      %v2204 = vpack.c.b16 %v2185, %v2184
      %v2205 = vpack.c.b16 %v2187, %v2186
      %v2206 = vpack.c.b16 %v2189, %v2188
      %v2207 = vpack.c.b16 %v2191, %v2190
      %2224 = vmatprep.subr.bf16.mxu0 0
      %2225 = vmatpush1.bf16.msra.mxu0 %v2192
      %2226 = vmatprep.subr.bf16.mxu0 0
      %2227 = vmatpush1.bf16.msra.mxu0 %v2193
      %2228 = vmatprep.subr.bf16.mxu0 0
      %2229 = vmatpush1.bf16.msra.mxu0 %v2194
      %2230 = vmatprep.subr.bf16.mxu0 0
      %2231 = vmatpush1.bf16.msra.mxu0 %v2195
      %2232 = vmatprep.subr.bf16.mxu0 0
      %2233 = vmatpush1.bf16.msra.mxu0 %v2196
      %2234 = vmatprep.subr.bf16.mxu0 0
      %2235 = vmatpush1.bf16.msra.mxu0 %v2197
      %2236 = vmatprep.subr.bf16.mxu0 0
      %2237 = vmatpush1.bf16.msra.mxu0 %v2198
      %2238 = vmatprep.subr.bf16.mxu0 0
      %2239 = vmatpush1.bf16.msra.mxu0 %v2199
      %2240 = vmatprep.subr.bf16.mxu0 0
      %2241 = vmatpush1.bf16.msra.mxu0 %v2200
      %2242 = vmatprep.subr.bf16.mxu0 0
      %2243 = vmatpush1.bf16.msra.mxu0 %v2201
      %2244 = vmatprep.subr.bf16.mxu0 0
      %2245 = vmatpush1.bf16.msra.mxu0 %v2202
      %2246 = vmatprep.subr.bf16.mxu0 0
      %2247 = vmatpush1.bf16.msra.mxu0 %v2203
      %2248 = vmatprep.subr.bf16.mxu0 0
      %2249 = vmatpush1.bf16.msra.mxu0 %v2204
      %2250 = vmatprep.subr.bf16.mxu0 0
      %2251 = vmatpush1.bf16.msra.mxu0 %v2205
      %2252 = vmatprep.subr.bf16.mxu0 0
      %2253 = vmatpush1.bf16.msra.mxu0 %v2206
      %2254 = vmatprep.subr.bf16.mxu0 0
      %2255 = vmatpush1.bf16.msra.mxu0 %v2207
      %2256 = vmatprep.mubr.bf16.mxu0 %v2088
      %2257 = vmatmul.mubr.bf16.gmra.mrb[0].mxu0 %v2087
      %v2258 = vpop.f32.mrb[0].mxu0
      %v2259 = vadd.f32 %v2126, %v2258
      %v2260 = vpop.f32.mrb[0].mxu0
      %v2261 = vpop.f32.mrb[0].mxu0
      %v2262 = vpop.f32.mrb[0].mxu0
      %2263 = vdwg.mxu0
      %2264 = vst [vmem:[#allocation12] sm:$0xff] %v2259
    $region57: #{_forward_jit.1} parent=1 // pred_fallthru
      _
    // Predicated region
    $region58: #{_forward_jit.1} parent=1 // pred_check
      _
    $region59: #{_forward_jit.1} parent=1 // pred_check_branch
      %2266 = sbr.rel (0) target = $region61
    $region60: #{_forward_jit.1} parent=1 // pred_region
      %s2268 = ssub.s32 128, 128
      %2269 = vsyncadd [#allocation5], %s2268
      %s2271 = sshll.u32 [#allocation12], 4
      %s2272 = int_to_ptr.vmem [resolvable:$true] %s2271
      %2274 = dma.vmem_to_hbm [thread:$0]  %s2272, 128, %s7, [#allocation5]
    $region61: #{_forward_jit.1} parent=1 // pred_fallthru
      _
    // Predicated region
    $region62: #{_forward_jit.1} parent=1 // pred_check
      _
    $region63: #{_forward_jit.1} parent=1 // pred_check_branch
      %2276 = sbr.rel (0) target = $region65
    $region64: #{_forward_jit.1} parent=1 // pred_region
      %2277 = dma.done [#allocation5], 128
    $region65: #{_forward_jit.1} parent=1 // pred_fallthru
      _
    %2278 = vsyncpa [#allocation4], 1
    %2279 = vsyncpa [#allocation7], 1
    %2280 = vsyncpa [#allocation10], 1
    %2281 = vsyncpa [#allocation5], 1

</llo_original>
